<compile_context>
chip_gen: v7x
topology: tpu7x:2x2x1
jax: 0.10.0
libtpu: 0.0.40
codegen_flags: <defaults>
</compile_context>

<pallas_src>
import jax
import jax.numpy as jnp
import numpy as np
from jax.experimental import pallas as pl
from jax.experimental.pallas import tpu as pltpu

EPS = 1e-6
_SQRT2_INV = 0.7071067811865476


def _gelu(x):
    # exact (erf) GELU -- matches torch.nn.GELU() default (approximate='none')
    return 0.5 * x * (1.0 + jax.lax.erf(x * _SQRT2_INV))


def _layernorm(x, gamma, beta):
    mu = jnp.mean(x, axis=-1, keepdims=True)
    var = jnp.mean((x - mu) ** 2, axis=-1, keepdims=True)
    return (x - mu) * jax.lax.rsqrt(var + EPS) * gamma + beta


# ---------------- fused kernel: stem + mixer blocks + head ----------------
def _fused_mixer_kernel(p_ref, sw_ref, sb_ref,
                        gpre_ref, bpre_ref, wt0_ref, bt0_ref, wt1_ref, bt1_ref,
                        gpost_ref, bpost_ref, wc0_ref, bc0_ref, wc1_ref, bc1_ref,
                        lng_ref, lnb_ref, hw_ref, hb_ref, o_ref):
    # stem: (S, K) @ (K, H) + (1, H)  -> (S, H)
    patches = p_ref[0]                                            # (S, K)
    x = (jnp.dot(patches, sw_ref[...], preferred_element_type=jnp.float32)
         + sb_ref[...])                                           # (S, H)

    num_blocks = wt0_ref.shape[0]
    for blk in range(num_blocks):                                 # static unroll
        # ---- token mixing (no explicit transposes) ----
        y = _layernorm(x, gpre_ref[blk], bpre_ref[blk])           # (S, H)
        # contract token axis of y against wt0's input axis -> (H, Dt)
        a = jax.lax.dot_general(
            y, wt0_ref[blk], (((0,), (0,)), ((), ())),
            preferred_element_type=jnp.float32)                   # (H, Dt)
        a = _gelu(a + bt0_ref[blk])                               # (H, Dt)
        # contract Dt so the result lands directly in (S, H) layout
        t = jax.lax.dot_general(
            wt1_ref[blk], a, (((0,), (1,)), ((), ())),
            preferred_element_type=jnp.float32)                   # (S, H)
        x = x + t + bt1_ref[blk]                                  # bt1: (S, 1)

        # ---- channel mixing ----
        z = _layernorm(x, gpost_ref[blk], bpost_ref[blk])         # (S, H)
        c = _gelu(jnp.dot(z, wc0_ref[blk],
                          preferred_element_type=jnp.float32)
                  + bc0_ref[blk])                                 # (S, Dc)
        x = x + (jnp.dot(c, wc1_ref[blk],
                         preferred_element_type=jnp.float32)
                 + bc1_ref[blk])                                  # (S, H)

    # ---- head: pre_head_ln + mean over tokens + Linear ----
    y = _layernorm(x, lng_ref[...], lnb_ref[...])                 # (S, H)
    m = jnp.mean(y, axis=0, keepdims=True)                        # (1, H)
    o_ref[0] = (jnp.dot(m, hw_ref[...], preferred_element_type=jnp.float32)
                + hb_ref[...])                                    # (1, NC)


def _full_spec(shape):
    n = len(shape)
    return pl.BlockSpec(shape, lambda b, _n=n: (0,) * _n)


def fused_mixer_call(patches, stem_w, stem_b, blk_stacks, ln_g, ln_b,
                     head_w, head_b):
    B, S, K = patches.shape
    NC = head_w.shape[1]
    (gpre, bpre, wt0, bt0, wt1, bt1, gpost, bpost, wc0, bc0, wc1, bc1) = blk_stacks

    out = pl.pallas_call(
        _fused_mixer_kernel,
        out_shape=jax.ShapeDtypeStruct((B, 1, NC), jnp.float32),
        grid=(B,),
        in_specs=[
            pl.BlockSpec((1, S, K), lambda b: (b, 0, 0)),         # patches
            _full_spec(stem_w.shape), _full_spec(stem_b.shape),   # stem
            _full_spec(gpre.shape), _full_spec(bpre.shape),       # pre_norm
            _full_spec(wt0.shape), _full_spec(bt0.shape),         # token fc0
            _full_spec(wt1.shape), _full_spec(bt1.shape),         # token fc1
            _full_spec(gpost.shape), _full_spec(bpost.shape),     # post_norm
            _full_spec(wc0.shape), _full_spec(bc0.shape),         # channel fc0
            _full_spec(wc1.shape), _full_spec(bc1.shape),         # channel fc1
            _full_spec(ln_g.shape), _full_spec(ln_b.shape),       # pre_head_ln
            _full_spec(head_w.shape), _full_spec(head_b.shape),   # head
        ],
        out_specs=pl.BlockSpec((1, 1, NC), lambda b: (b, 0, 0)),
        compiler_params=pltpu.CompilerParams(
            dimension_semantics=("parallel",)),
    )(patches, stem_w, stem_b,
      gpre, bpre, wt0, bt0, wt1, bt1, gpost, bpost, wc0, bc0, wc1, bc1,
      ln_g, ln_b, head_w, head_b)
    return out.reshape(B, NC)


# ---------------- full forward (Pallas) ----------------
def mlp_mixer_forward(x_nchw, params):
    B, C, Himg, Wimg = x_nchw.shape
    P = params["patch"]
    hp, wp = Himg // P, Wimg // P
    S = hp * wp
    HID = params["stem_w"].shape[0]

    # im2col: (B, S, C*P*P) with (c, kh, kw) ordering == OIHW kernel flatten
    patches = (
        x_nchw.reshape(B, C, hp, P, wp, P)
        .transpose(0, 2, 4, 1, 3, 5)
        .reshape(B, S, C * P * P)
    )
    w_stem = params["stem_w"].reshape(HID, -1).T          # (C*P*P, HID)
    b_stem = params["stem_b"].reshape(1, -1)              # (1, HID)

    # stack per-block weights along a leading num_blocks axis
    def stack(i, reshape=None):
        arrs = [blk[i] for blk in params["blocks"]]
        if reshape is not None:
            arrs = [a.reshape(reshape) for a in arrs]
        return jnp.stack(arrs, axis=0)

    blk_stacks = (
        stack(0, (1, HID)),    # pre_norm gamma  -> (NB, 1, H)
        stack(1, (1, HID)),    # pre_norm beta   -> (NB, 1, H)
        stack(2),              # token fc0 W     -> (NB, S, Dt)
        stack(3, (1, -1)),     # token fc0 b     -> (NB, 1, Dt)
        stack(4),              # token fc1 W     -> (NB, Dt, S)
        stack(5, (-1, 1)),     # token fc1 b     -> (NB, S, 1)
        stack(6, (1, HID)),    # post_norm gamma -> (NB, 1, H)
        stack(7, (1, HID)),    # post_norm beta  -> (NB, 1, H)
        stack(8),              # channel fc0 W   -> (NB, H, Dc)
        stack(9, (1, -1)),     # channel fc0 b   -> (NB, 1, Dc)
        stack(10),             # channel fc1 W   -> (NB, Dc, H)
        stack(11, (1, HID)),   # channel fc1 b   -> (NB, 1, H)
    )

    return fused_mixer_call(
        patches, w_stem, b_stem, blk_stacks,
        params["ln_g"].reshape(1, -1), params["ln_b"].reshape(1, -1),
        params["head_w"], params["head_b"].reshape(1, -1),
    )


# ---------------- pure-JAX reference ----------------
def _ref_forward(x_nchw, params):
    B, C, Himg, Wimg = x_nchw.shape
    P = params["patch"]
    hp, wp = Himg // P, Wimg // P
    HID = params["stem_w"].shape[0]

    patches = (
        x_nchw.reshape(B, C, hp, P, wp, P)
        .transpose(0, 2, 4, 1, 3, 5)
        .reshape(B, hp * wp, C * P * P)
    )
    h = patches @ params["stem_w"].reshape(HID, -1).T + params["stem_b"]

    def ln(x, g, b):
        mu = jnp.mean(x, axis=-1, keepdims=True)
        var = jnp.mean((x - mu) ** 2, axis=-1, keepdims=True)
        return (x - mu) / jnp.sqrt(var + EPS) * g + b

    def gelu(x):
        return 0.5 * x * (1.0 + jax.lax.erf(x * _SQRT2_INV))

    for (gpre, bpre, wt0, bt0, wt1, bt1, gpost, bpost,
         wc0, bc0, wc1, bc1) in params["blocks"]:
        y = ln(h, gpre, bpre)
        yt = jnp.swapaxes(y, -1, -2)
        t = gelu(yt @ wt0 + bt0) @ wt1 + bt1
        h = h + jnp.swapaxes(t, -1, -2)
        z = ln(h, gpost, bpost)
        h = h + (gelu(z @ wc0 + bc0) @ wc1 + bc1)

    y = ln(h, params["ln_g"], params["ln_b"])
    m = jnp.mean(y, axis=1)
    return m @ params["head_w"] + params["head_b"]


# ---------------- deterministic param init ----------------
def init_params(key, *, C=3, patch=8, hidden=32, tok_dim=16, cha_dim=64,
                num_blocks=2, num_classes=10, n_patches=16):
    ks = iter(jax.random.split(key, 8 + 8 * num_blocks))
    nrm = lambda k, shp: 0.02 * jax.random.normal(k, shp, jnp.float32)

    params = {
        "patch": patch,
        "stem_w": nrm(next(ks), (hidden, C, patch, patch)),   # OIHW
        "stem_b": nrm(next(ks), (hidden,)),
        "blocks": [],
        "ln_g": jnp.ones((hidden,), jnp.float32),
        "ln_b": jnp.zeros((hidden,), jnp.float32),
        "head_w": nrm(next(ks), (hidden, num_classes)),
        "head_b": nrm(next(ks), (num_classes,)),
    }
    for _ in range(num_blocks):
        blk = (
            jnp.ones((hidden,), jnp.float32),                 # pre_norm gamma
            jnp.zeros((hidden,), jnp.float32),                # pre_norm beta
            nrm(next(ks), (n_patches, tok_dim)),              # token fc0 W (in,out)
            nrm(next(ks), (tok_dim,)),                        # token fc0 b
            nrm(next(ks), (tok_dim, n_patches)),              # token fc1 W
            nrm(next(ks), (n_patches,)),                      # token fc1 b
            jnp.ones((hidden,), jnp.float32),                 # post_norm gamma
            jnp.zeros((hidden,), jnp.float32),                # post_norm beta
            nrm(next(ks), (hidden, cha_dim)),                 # channel fc0 W
            nrm(next(ks), (cha_dim,)),                        # channel fc0 b
            nrm(next(ks), (cha_dim, hidden)),                 # channel fc1 W
            nrm(next(ks), (hidden,)),                         # channel fc1 b
        )
        params["blocks"].append(blk)
    return params


if __name__ == "__main__":
    key = jax.random.PRNGKey(0)
    kx, kp = jax.random.split(key)

    B, C, IMG, P = 2, 3, 32, 8
    HID, TOK, CHA, NB, NC = 32, 16, 64, 2, 10
    S = (IMG // P) * (IMG // P)                           # n_patches = 16

    x = jax.random.normal(kx, (B, C, IMG, IMG), jnp.float32)
    params = init_params(kp, C=C, patch=P, hidden=HID, tok_dim=TOK,
                         cha_dim=CHA, num_blocks=NB, num_classes=NC,
                         n_patches=S)

    out = mlp_mixer_forward(x, params)
    out = jax.block_until_ready(out)

    ref = jax.block_until_ready(_ref_forward(x, params))
    np.testing.assert_allclose(np.asarray(out), np.asarray(ref),
                               rtol=2e-2, atol=2e-2)

    assert out.shape == (B, NC)
    print("KERNEL_OK")
</pallas_src>

<mosaic_0001>
module attributes {stable_mosaic.version = 11 : i64} {
  func.func @_fused_mixer_kernel(%arg0: i32, %arg1: memref<1x16x192xf32, #tpu.memory_space<vmem>>, %arg2: memref<192x32xf32, #tpu.memory_space<vmem>>, %arg3: memref<1x32xf32, #tpu.memory_space<vmem>>, %arg4: memref<2x1x32xf32, #tpu.memory_space<vmem>>, %arg5: memref<2x1x32xf32, #tpu.memory_space<vmem>>, %arg6: memref<2x16x16xf32, #tpu.memory_space<vmem>>, %arg7: memref<2x1x16xf32, #tpu.memory_space<vmem>>, %arg8: memref<2x16x16xf32, #tpu.memory_space<vmem>>, %arg9: memref<2x16x1xf32, #tpu.memory_space<vmem>>, %arg10: memref<2x1x32xf32, #tpu.memory_space<vmem>>, %arg11: memref<2x1x32xf32, #tpu.memory_space<vmem>>, %arg12: memref<2x32x64xf32, #tpu.memory_space<vmem>>, %arg13: memref<2x1x64xf32, #tpu.memory_space<vmem>>, %arg14: memref<2x64x32xf32, #tpu.memory_space<vmem>>, %arg15: memref<2x1x32xf32, #tpu.memory_space<vmem>>, %arg16: memref<1x32xf32, #tpu.memory_space<vmem>>, %arg17: memref<1x32xf32, #tpu.memory_space<vmem>>, %arg18: memref<32x10xf32, #tpu.memory_space<vmem>>, %arg19: memref<1x10xf32, #tpu.memory_space<vmem>>, %arg20: memref<1x1x10xf32, #tpu.memory_space<vmem>>) attributes {dimension_semantics = [#tpu.dimension_semantics<parallel>], iteration_bounds = array<i64: 2>, scalar_prefetch = 0 : i64, scratch_operands = 0 : i64, tpu.core_type = #tpu.core_type<tc>, window_params = [{transform_indices = @transform_0, window_bounds = array<i64: 1, 16, 192>}, {pipeline_mode = #tpu.pipeline_mode<synchronous>, transform_indices = @transform_1, window_bounds = array<i64: 192, 32>}, {pipeline_mode = #tpu.pipeline_mode<synchronous>, transform_indices = @transform_2, window_bounds = array<i64: 1, 32>}, {pipeline_mode = #tpu.pipeline_mode<synchronous>, transform_indices = @transform_3, window_bounds = array<i64: 2, 1, 32>}, {pipeline_mode = #tpu.pipeline_mode<synchronous>, transform_indices = @transform_4, window_bounds = array<i64: 2, 1, 32>}, {pipeline_mode = #tpu.pipeline_mode<synchronous>, transform_indices = @transform_5, window_bounds = array<i64: 2, 16, 16>}, {pipeline_mode = #tpu.pipeline_mode<synchronous>, transform_indices = @transform_6, window_bounds = array<i64: 2, 1, 16>}, {pipeline_mode = #tpu.pipeline_mode<synchronous>, transform_indices = @transform_7, window_bounds = array<i64: 2, 16, 16>}, {pipeline_mode = #tpu.pipeline_mode<synchronous>, transform_indices = @transform_8, window_bounds = array<i64: 2, 16, 1>}, {pipeline_mode = #tpu.pipeline_mode<synchronous>, transform_indices = @transform_9, window_bounds = array<i64: 2, 1, 32>}, {pipeline_mode = #tpu.pipeline_mode<synchronous>, transform_indices = @transform_10, window_bounds = array<i64: 2, 1, 32>}, {pipeline_mode = #tpu.pipeline_mode<synchronous>, transform_indices = @transform_11, window_bounds = array<i64: 2, 32, 64>}, {pipeline_mode = #tpu.pipeline_mode<synchronous>, transform_indices = @transform_12, window_bounds = array<i64: 2, 1, 64>}, {pipeline_mode = #tpu.pipeline_mode<synchronous>, transform_indices = @transform_13, window_bounds = array<i64: 2, 64, 32>}, {pipeline_mode = #tpu.pipeline_mode<synchronous>, transform_indices = @transform_14, window_bounds = array<i64: 2, 1, 32>}, {pipeline_mode = #tpu.pipeline_mode<synchronous>, transform_indices = @transform_15, window_bounds = array<i64: 1, 32>}, {pipeline_mode = #tpu.pipeline_mode<synchronous>, transform_indices = @transform_16, window_bounds = array<i64: 1, 32>}, {pipeline_mode = #tpu.pipeline_mode<synchronous>, transform_indices = @transform_17, window_bounds = array<i64: 32, 10>}, {pipeline_mode = #tpu.pipeline_mode<synchronous>, transform_indices = @transform_18, window_bounds = array<i64: 1, 10>}, {transform_indices = @transform_19, window_bounds = array<i64: 1, 1, 10>}]} {
    %c0 = arith.constant 0 : index
    %c0_0 = arith.constant 0 : index
    %c0_1 = arith.constant 0 : index
    %0 = vector.load %arg1[%c0, %c0_0, %c0_1] : memref<1x16x192xf32, #tpu.memory_space<vmem>>, vector<1x16x192xf32>
    %1 = vector.shape_cast %0 : vector<1x16x192xf32> to vector<16x192xf32>
    %c0_2 = arith.constant 0 : index
    %c0_3 = arith.constant 0 : index
    %2 = vector.load %arg2[%c0_2, %c0_3] : memref<192x32xf32, #tpu.memory_space<vmem>>, vector<192x32xf32>
    %cst = arith.constant dense<0.000000e+00> : vector<16x32xf32>
    %3 = tpu.matmul %1, %2, %cst {dimension_numbers = #tpu.dot_dimension_numbers<[1], [0], [0], [1], [0, 0, 1, 1], [], []>} : vector<16x192xf32>, vector<192x32xf32>, vector<16x32xf32> -> vector<16x32xf32>
    %c0_4 = arith.constant 0 : index
    %c0_5 = arith.constant 0 : index
    %4 = vector.load %arg3[%c0_4, %c0_5] : memref<1x32xf32, #tpu.memory_space<vmem>>, vector<1x32xf32>
    %5 = vector.broadcast %4 : vector<1x32xf32> to vector<16x32xf32>
    %6 = arith.addf %3, %5 : vector<16x32xf32>
    %c0_6 = arith.constant 0 : index
    %c0_7 = arith.constant 0 : index
    %c0_8 = arith.constant 0 : index
    %7 = vector.load %arg4[%c0_6, %c0_7, %c0_8] : memref<2x1x32xf32, #tpu.memory_space<vmem>>, vector<1x1x32xf32>
    %8 = vector.shape_cast %7 : vector<1x1x32xf32> to vector<1x32xf32>
    %c0_9 = arith.constant 0 : index
    %c0_10 = arith.constant 0 : index
    %c0_11 = arith.constant 0 : index
    %9 = vector.load %arg5[%c0_9, %c0_10, %c0_11] : memref<2x1x32xf32, #tpu.memory_space<vmem>>, vector<1x1x32xf32>
    %10 = vector.shape_cast %9 : vector<1x1x32xf32> to vector<1x32xf32>
    %cst_12 = arith.constant dense<0.000000e+00> : vector<16xf32>
    %11 = vector.multi_reduction <add>, %6, %cst_12 [1] : vector<16x32xf32> to vector<16xf32>
    %12 = vector.shape_cast %11 : vector<16xf32> to vector<16x1xf32>
    %cst_13 = arith.constant 3.200000e+01 : f32
    %13 = vector.broadcast %cst_13 : f32 to vector<16x1xf32>
    %14 = arith.divf %12, %13 : vector<16x1xf32>
    %15 = vector.broadcast %14 : vector<16x1xf32> to vector<16x32xf32>
    %16 = arith.subf %6, %15 : vector<16x32xf32>
    %17 = arith.mulf %16, %16 : vector<16x32xf32>
    %cst_14 = arith.constant dense<0.000000e+00> : vector<16xf32>
    %18 = vector.multi_reduction <add>, %17, %cst_14 [1] : vector<16x32xf32> to vector<16xf32>
    %19 = vector.shape_cast %18 : vector<16xf32> to vector<16x1xf32>
    %cst_15 = arith.constant 3.200000e+01 : f32
    %20 = vector.broadcast %cst_15 : f32 to vector<16x1xf32>
    %21 = arith.divf %19, %20 : vector<16x1xf32>
    %22 = vector.broadcast %14 : vector<16x1xf32> to vector<16x32xf32>
    %23 = arith.subf %6, %22 : vector<16x32xf32>
    %cst_16 = arith.constant 9.99999997E-7 : f32
    %24 = vector.broadcast %cst_16 : f32 to vector<16x1xf32>
    %25 = arith.addf %21, %24 : vector<16x1xf32>
    %26 = math.rsqrt %25 : vector<16x1xf32>
    %27 = vector.broadcast %26 : vector<16x1xf32> to vector<16x32xf32>
    %28 = arith.mulf %23, %27 : vector<16x32xf32>
    %29 = vector.broadcast %8 : vector<1x32xf32> to vector<16x32xf32>
    %30 = arith.mulf %28, %29 : vector<16x32xf32>
    %31 = vector.broadcast %10 : vector<1x32xf32> to vector<16x32xf32>
    %32 = arith.addf %30, %31 : vector<16x32xf32>
    %c0_17 = arith.constant 0 : index
    %c0_18 = arith.constant 0 : index
    %c0_19 = arith.constant 0 : index
    %33 = vector.load %arg6[%c0_17, %c0_18, %c0_19] : memref<2x16x16xf32, #tpu.memory_space<vmem>>, vector<1x16x16xf32>
    %34 = vector.shape_cast %33 : vector<1x16x16xf32> to vector<16x16xf32>
    %cst_20 = arith.constant dense<0.000000e+00> : vector<32x16xf32>
    %35 = tpu.matmul %32, %34, %cst_20 {dimension_numbers = #tpu.dot_dimension_numbers<[0], [0], [1], [1], [0, 1, 1, 1], [], []>} : vector<16x32xf32>, vector<16x16xf32>, vector<32x16xf32> -> vector<32x16xf32>
    %c0_21 = arith.constant 0 : index
    %c0_22 = arith.constant 0 : index
    %c0_23 = arith.constant 0 : index
    %36 = vector.load %arg7[%c0_21, %c0_22, %c0_23] : memref<2x1x16xf32, #tpu.memory_space<vmem>>, vector<1x1x16xf32>
    %37 = vector.shape_cast %36 : vector<1x1x16xf32> to vector<1x16xf32>
    %38 = vector.broadcast %37 : vector<1x16xf32> to vector<32x16xf32>
    %39 = arith.addf %35, %38 : vector<32x16xf32>
    %cst_24 = arith.constant 5.000000e-01 : f32
    %40 = vector.broadcast %cst_24 : f32 to vector<32x16xf32>
    %41 = arith.mulf %40, %39 : vector<32x16xf32>
    %cst_25 = arith.constant 0.707106769 : f32
    %42 = vector.broadcast %cst_25 : f32 to vector<32x16xf32>
    %43 = arith.mulf %39, %42 : vector<32x16xf32>
    %44 = math.erf %43 : vector<32x16xf32>
    %cst_26 = arith.constant 1.000000e+00 : f32
    %45 = vector.broadcast %cst_26 : f32 to vector<32x16xf32>
    %46 = arith.addf %45, %44 : vector<32x16xf32>
    %47 = arith.mulf %41, %46 : vector<32x16xf32>
    %c0_27 = arith.constant 0 : index
    %c0_28 = arith.constant 0 : index
    %c0_29 = arith.constant 0 : index
    %48 = vector.load %arg8[%c0_27, %c0_28, %c0_29] : memref<2x16x16xf32, #tpu.memory_space<vmem>>, vector<1x16x16xf32>
    %49 = vector.shape_cast %48 : vector<1x16x16xf32> to vector<16x16xf32>
    %cst_30 = arith.constant dense<0.000000e+00> : vector<16x32xf32>
    %50 = tpu.matmul %49, %47, %cst_30 {dimension_numbers = #tpu.dot_dimension_numbers<[0], [1], [1], [0], [0, 1, 1, 0], [], []>} : vector<16x16xf32>, vector<32x16xf32>, vector<16x32xf32> -> vector<16x32xf32>
    %51 = arith.addf %6, %50 : vector<16x32xf32>
    %c0_31 = arith.constant 0 : index
    %c0_32 = arith.constant 0 : index
    %c0_33 = arith.constant 0 : index
    %52 = vector.load %arg9[%c0_31, %c0_32, %c0_33] : memref<2x16x1xf32, #tpu.memory_space<vmem>>, vector<1x16x1xf32>
    %53 = vector.shape_cast %52 : vector<1x16x1xf32> to vector<16x1xf32>
    %54 = vector.broadcast %53 : vector<16x1xf32> to vector<16x32xf32>
    %55 = arith.addf %51, %54 : vector<16x32xf32>
    %c0_34 = arith.constant 0 : index
    %c0_35 = arith.constant 0 : index
    %c0_36 = arith.constant 0 : index
    %56 = vector.load %arg10[%c0_34, %c0_35, %c0_36] : memref<2x1x32xf32, #tpu.memory_space<vmem>>, vector<1x1x32xf32>
    %57 = vector.shape_cast %56 : vector<1x1x32xf32> to vector<1x32xf32>
    %c0_37 = arith.constant 0 : index
    %c0_38 = arith.constant 0 : index
    %c0_39 = arith.constant 0 : index
    %58 = vector.load %arg11[%c0_37, %c0_38, %c0_39] : memref<2x1x32xf32, #tpu.memory_space<vmem>>, vector<1x1x32xf32>
    %59 = vector.shape_cast %58 : vector<1x1x32xf32> to vector<1x32xf32>
    %cst_40 = arith.constant dense<0.000000e+00> : vector<16xf32>
    %60 = vector.multi_reduction <add>, %55, %cst_40 [1] : vector<16x32xf32> to vector<16xf32>
    %61 = vector.shape_cast %60 : vector<16xf32> to vector<16x1xf32>
    %cst_41 = arith.constant 3.200000e+01 : f32
    %62 = vector.broadcast %cst_41 : f32 to vector<16x1xf32>
    %63 = arith.divf %61, %62 : vector<16x1xf32>
    %64 = vector.broadcast %63 : vector<16x1xf32> to vector<16x32xf32>
    %65 = arith.subf %55, %64 : vector<16x32xf32>
    %66 = arith.mulf %65, %65 : vector<16x32xf32>
    %cst_42 = arith.constant dense<0.000000e+00> : vector<16xf32>
    %67 = vector.multi_reduction <add>, %66, %cst_42 [1] : vector<16x32xf32> to vector<16xf32>
    %68 = vector.shape_cast %67 : vector<16xf32> to vector<16x1xf32>
    %cst_43 = arith.constant 3.200000e+01 : f32
    %69 = vector.broadcast %cst_43 : f32 to vector<16x1xf32>
    %70 = arith.divf %68, %69 : vector<16x1xf32>
    %71 = vector.broadcast %63 : vector<16x1xf32> to vector<16x32xf32>
    %72 = arith.subf %55, %71 : vector<16x32xf32>
    %cst_44 = arith.constant 9.99999997E-7 : f32
    %73 = vector.broadcast %cst_44 : f32 to vector<16x1xf32>
    %74 = arith.addf %70, %73 : vector<16x1xf32>
    %75 = math.rsqrt %74 : vector<16x1xf32>
    %76 = vector.broadcast %75 : vector<16x1xf32> to vector<16x32xf32>
    %77 = arith.mulf %72, %76 : vector<16x32xf32>
    %78 = vector.broadcast %57 : vector<1x32xf32> to vector<16x32xf32>
    %79 = arith.mulf %77, %78 : vector<16x32xf32>
    %80 = vector.broadcast %59 : vector<1x32xf32> to vector<16x32xf32>
    %81 = arith.addf %79, %80 : vector<16x32xf32>
    %c0_45 = arith.constant 0 : index
    %c0_46 = arith.constant 0 : index
    %c0_47 = arith.constant 0 : index
    %82 = vector.load %arg12[%c0_45, %c0_46, %c0_47] : memref<2x32x64xf32, #tpu.memory_space<vmem>>, vector<1x32x64xf32>
    %83 = vector.shape_cast %82 : vector<1x32x64xf32> to vector<32x64xf32>
    %cst_48 = arith.constant dense<0.000000e+00> : vector<16x64xf32>
    %84 = tpu.matmul %81, %83, %cst_48 {dimension_numbers = #tpu.dot_dimension_numbers<[1], [0], [0], [1], [0, 0, 1, 1], [], []>} : vector<16x32xf32>, vector<32x64xf32>, vector<16x64xf32> -> vector<16x64xf32>
    %c0_49 = arith.constant 0 : index
    %c0_50 = arith.constant 0 : index
    %c0_51 = arith.constant 0 : index
    %85 = vector.load %arg13[%c0_49, %c0_50, %c0_51] : memref<2x1x64xf32, #tpu.memory_space<vmem>>, vector<1x1x64xf32>
    %86 = vector.shape_cast %85 : vector<1x1x64xf32> to vector<1x64xf32>
    %87 = vector.broadcast %86 : vector<1x64xf32> to vector<16x64xf32>
    %88 = arith.addf %84, %87 : vector<16x64xf32>
    %cst_52 = arith.constant 5.000000e-01 : f32
    %89 = vector.broadcast %cst_52 : f32 to vector<16x64xf32>
    %90 = arith.mulf %89, %88 : vector<16x64xf32>
    %cst_53 = arith.constant 0.707106769 : f32
    %91 = vector.broadcast %cst_53 : f32 to vector<16x64xf32>
    %92 = arith.mulf %88, %91 : vector<16x64xf32>
    %93 = math.erf %92 : vector<16x64xf32>
    %cst_54 = arith.constant 1.000000e+00 : f32
    %94 = vector.broadcast %cst_54 : f32 to vector<16x64xf32>
    %95 = arith.addf %94, %93 : vector<16x64xf32>
    %96 = arith.mulf %90, %95 : vector<16x64xf32>
    %c0_55 = arith.constant 0 : index
    %c0_56 = arith.constant 0 : index
    %c0_57 = arith.constant 0 : index
    %97 = vector.load %arg14[%c0_55, %c0_56, %c0_57] : memref<2x64x32xf32, #tpu.memory_space<vmem>>, vector<1x64x32xf32>
    %98 = vector.shape_cast %97 : vector<1x64x32xf32> to vector<64x32xf32>
    %cst_58 = arith.constant dense<0.000000e+00> : vector<16x32xf32>
    %99 = tpu.matmul %96, %98, %cst_58 {dimension_numbers = #tpu.dot_dimension_numbers<[1], [0], [0], [1], [0, 0, 1, 1], [], []>} : vector<16x64xf32>, vector<64x32xf32>, vector<16x32xf32> -> vector<16x32xf32>
    %c0_59 = arith.constant 0 : index
    %c0_60 = arith.constant 0 : index
    %c0_61 = arith.constant 0 : index
    %100 = vector.load %arg15[%c0_59, %c0_60, %c0_61] : memref<2x1x32xf32, #tpu.memory_space<vmem>>, vector<1x1x32xf32>
    %101 = vector.shape_cast %100 : vector<1x1x32xf32> to vector<1x32xf32>
    %102 = vector.broadcast %101 : vector<1x32xf32> to vector<16x32xf32>
    %103 = arith.addf %99, %102 : vector<16x32xf32>
    %104 = arith.addf %55, %103 : vector<16x32xf32>
    %c1 = arith.constant 1 : index
    %c0_62 = arith.constant 0 : index
    %c0_63 = arith.constant 0 : index
    %105 = vector.load %arg4[%c1, %c0_62, %c0_63] : memref<2x1x32xf32, #tpu.memory_space<vmem>>, vector<1x1x32xf32>
    %106 = vector.shape_cast %105 : vector<1x1x32xf32> to vector<1x32xf32>
    %c1_64 = arith.constant 1 : index
    %c0_65 = arith.constant 0 : index
    %c0_66 = arith.constant 0 : index
    %107 = vector.load %arg5[%c1_64, %c0_65, %c0_66] : memref<2x1x32xf32, #tpu.memory_space<vmem>>, vector<1x1x32xf32>
    %108 = vector.shape_cast %107 : vector<1x1x32xf32> to vector<1x32xf32>
    %cst_67 = arith.constant dense<0.000000e+00> : vector<16xf32>
    %109 = vector.multi_reduction <add>, %104, %cst_67 [1] : vector<16x32xf32> to vector<16xf32>
    %110 = vector.shape_cast %109 : vector<16xf32> to vector<16x1xf32>
    %cst_68 = arith.constant 3.200000e+01 : f32
    %111 = vector.broadcast %cst_68 : f32 to vector<16x1xf32>
    %112 = arith.divf %110, %111 : vector<16x1xf32>
    %113 = vector.broadcast %112 : vector<16x1xf32> to vector<16x32xf32>
    %114 = arith.subf %104, %113 : vector<16x32xf32>
    %115 = arith.mulf %114, %114 : vector<16x32xf32>
    %cst_69 = arith.constant dense<0.000000e+00> : vector<16xf32>
    %116 = vector.multi_reduction <add>, %115, %cst_69 [1] : vector<16x32xf32> to vector<16xf32>
    %117 = vector.shape_cast %116 : vector<16xf32> to vector<16x1xf32>
    %cst_70 = arith.constant 3.200000e+01 : f32
    %118 = vector.broadcast %cst_70 : f32 to vector<16x1xf32>
    %119 = arith.divf %117, %118 : vector<16x1xf32>
    %120 = vector.broadcast %112 : vector<16x1xf32> to vector<16x32xf32>
    %121 = arith.subf %104, %120 : vector<16x32xf32>
    %cst_71 = arith.constant 9.99999997E-7 : f32
    %122 = vector.broadcast %cst_71 : f32 to vector<16x1xf32>
    %123 = arith.addf %119, %122 : vector<16x1xf32>
    %124 = math.rsqrt %123 : vector<16x1xf32>
    %125 = vector.broadcast %124 : vector<16x1xf32> to vector<16x32xf32>
    %126 = arith.mulf %121, %125 : vector<16x32xf32>
    %127 = vector.broadcast %106 : vector<1x32xf32> to vector<16x32xf32>
    %128 = arith.mulf %126, %127 : vector<16x32xf32>
    %129 = vector.broadcast %108 : vector<1x32xf32> to vector<16x32xf32>
    %130 = arith.addf %128, %129 : vector<16x32xf32>
    %c1_72 = arith.constant 1 : index
    %c0_73 = arith.constant 0 : index
    %c0_74 = arith.constant 0 : index
    %131 = vector.load %arg6[%c1_72, %c0_73, %c0_74] : memref<2x16x16xf32, #tpu.memory_space<vmem>>, vector<1x16x16xf32>
    %132 = vector.shape_cast %131 : vector<1x16x16xf32> to vector<16x16xf32>
    %cst_75 = arith.constant dense<0.000000e+00> : vector<32x16xf32>
    %133 = tpu.matmul %130, %132, %cst_75 {dimension_numbers = #tpu.dot_dimension_numbers<[0], [0], [1], [1], [0, 1, 1, 1], [], []>} : vector<16x32xf32>, vector<16x16xf32>, vector<32x16xf32> -> vector<32x16xf32>
    %c1_76 = arith.constant 1 : index
    %c0_77 = arith.constant 0 : index
    %c0_78 = arith.constant 0 : index
    %134 = vector.load %arg7[%c1_76, %c0_77, %c0_78] : memref<2x1x16xf32, #tpu.memory_space<vmem>>, vector<1x1x16xf32>
    %135 = vector.shape_cast %134 : vector<1x1x16xf32> to vector<1x16xf32>
    %136 = vector.broadcast %135 : vector<1x16xf32> to vector<32x16xf32>
    %137 = arith.addf %133, %136 : vector<32x16xf32>
    %cst_79 = arith.constant 5.000000e-01 : f32
    %138 = vector.broadcast %cst_79 : f32 to vector<32x16xf32>
    %139 = arith.mulf %138, %137 : vector<32x16xf32>
    %cst_80 = arith.constant 0.707106769 : f32
    %140 = vector.broadcast %cst_80 : f32 to vector<32x16xf32>
    %141 = arith.mulf %137, %140 : vector<32x16xf32>
    %142 = math.erf %141 : vector<32x16xf32>
    %cst_81 = arith.constant 1.000000e+00 : f32
    %143 = vector.broadcast %cst_81 : f32 to vector<32x16xf32>
    %144 = arith.addf %143, %142 : vector<32x16xf32>
    %145 = arith.mulf %139, %144 : vector<32x16xf32>
    %c1_82 = arith.constant 1 : index
    %c0_83 = arith.constant 0 : index
    %c0_84 = arith.constant 0 : index
    %146 = vector.load %arg8[%c1_82, %c0_83, %c0_84] : memref<2x16x16xf32, #tpu.memory_space<vmem>>, vector<1x16x16xf32>
    %147 = vector.shape_cast %146 : vector<1x16x16xf32> to vector<16x16xf32>
    %cst_85 = arith.constant dense<0.000000e+00> : vector<16x32xf32>
    %148 = tpu.matmul %147, %145, %cst_85 {dimension_numbers = #tpu.dot_dimension_numbers<[0], [1], [1], [0], [0, 1, 1, 0], [], []>} : vector<16x16xf32>, vector<32x16xf32>, vector<16x32xf32> -> vector<16x32xf32>
    %149 = arith.addf %104, %148 : vector<16x32xf32>
    %c1_86 = arith.constant 1 : index
    %c0_87 = arith.constant 0 : index
    %c0_88 = arith.constant 0 : index
    %150 = vector.load %arg9[%c1_86, %c0_87, %c0_88] : memref<2x16x1xf32, #tpu.memory_space<vmem>>, vector<1x16x1xf32>
    %151 = vector.shape_cast %150 : vector<1x16x1xf32> to vector<16x1xf32>
    %152 = vector.broadcast %151 : vector<16x1xf32> to vector<16x32xf32>
    %153 = arith.addf %149, %152 : vector<16x32xf32>
    %c1_89 = arith.constant 1 : index
    %c0_90 = arith.constant 0 : index
    %c0_91 = arith.constant 0 : index
    %154 = vector.load %arg10[%c1_89, %c0_90, %c0_91] : memref<2x1x32xf32, #tpu.memory_space<vmem>>, vector<1x1x32xf32>
    %155 = vector.shape_cast %154 : vector<1x1x32xf32> to vector<1x32xf32>
    %c1_92 = arith.constant 1 : index
    %c0_93 = arith.constant 0 : index
    %c0_94 = arith.constant 0 : index
    %156 = vector.load %arg11[%c1_92, %c0_93, %c0_94] : memref<2x1x32xf32, #tpu.memory_space<vmem>>, vector<1x1x32xf32>
    %157 = vector.shape_cast %156 : vector<1x1x32xf32> to vector<1x32xf32>
    %cst_95 = arith.constant dense<0.000000e+00> : vector<16xf32>
    %158 = vector.multi_reduction <add>, %153, %cst_95 [1] : vector<16x32xf32> to vector<16xf32>
    %159 = vector.shape_cast %158 : vector<16xf32> to vector<16x1xf32>
    %cst_96 = arith.constant 3.200000e+01 : f32
    %160 = vector.broadcast %cst_96 : f32 to vector<16x1xf32>
    %161 = arith.divf %159, %160 : vector<16x1xf32>
    %162 = vector.broadcast %161 : vector<16x1xf32> to vector<16x32xf32>
    %163 = arith.subf %153, %162 : vector<16x32xf32>
    %164 = arith.mulf %163, %163 : vector<16x32xf32>
    %cst_97 = arith.constant dense<0.000000e+00> : vector<16xf32>
    %165 = vector.multi_reduction <add>, %164, %cst_97 [1] : vector<16x32xf32> to vector<16xf32>
    %166 = vector.shape_cast %165 : vector<16xf32> to vector<16x1xf32>
    %cst_98 = arith.constant 3.200000e+01 : f32
    %167 = vector.broadcast %cst_98 : f32 to vector<16x1xf32>
    %168 = arith.divf %166, %167 : vector<16x1xf32>
    %169 = vector.broadcast %161 : vector<16x1xf32> to vector<16x32xf32>
    %170 = arith.subf %153, %169 : vector<16x32xf32>
    %cst_99 = arith.constant 9.99999997E-7 : f32
    %171 = vector.broadcast %cst_99 : f32 to vector<16x1xf32>
    %172 = arith.addf %168, %171 : vector<16x1xf32>
    %173 = math.rsqrt %172 : vector<16x1xf32>
    %174 = vector.broadcast %173 : vector<16x1xf32> to vector<16x32xf32>
    %175 = arith.mulf %170, %174 : vector<16x32xf32>
    %176 = vector.broadcast %155 : vector<1x32xf32> to vector<16x32xf32>
    %177 = arith.mulf %175, %176 : vector<16x32xf32>
    %178 = vector.broadcast %157 : vector<1x32xf32> to vector<16x32xf32>
    %179 = arith.addf %177, %178 : vector<16x32xf32>
    %c1_100 = arith.constant 1 : index
    %c0_101 = arith.constant 0 : index
    %c0_102 = arith.constant 0 : index
    %180 = vector.load %arg12[%c1_100, %c0_101, %c0_102] : memref<2x32x64xf32, #tpu.memory_space<vmem>>, vector<1x32x64xf32>
    %181 = vector.shape_cast %180 : vector<1x32x64xf32> to vector<32x64xf32>
    %cst_103 = arith.constant dense<0.000000e+00> : vector<16x64xf32>
    %182 = tpu.matmul %179, %181, %cst_103 {dimension_numbers = #tpu.dot_dimension_numbers<[1], [0], [0], [1], [0, 0, 1, 1], [], []>} : vector<16x32xf32>, vector<32x64xf32>, vector<16x64xf32> -> vector<16x64xf32>
    %c1_104 = arith.constant 1 : index
    %c0_105 = arith.constant 0 : index
    %c0_106 = arith.constant 0 : index
    %183 = vector.load %arg13[%c1_104, %c0_105, %c0_106] : memref<2x1x64xf32, #tpu.memory_space<vmem>>, vector<1x1x64xf32>
    %184 = vector.shape_cast %183 : vector<1x1x64xf32> to vector<1x64xf32>
    %185 = vector.broadcast %184 : vector<1x64xf32> to vector<16x64xf32>
    %186 = arith.addf %182, %185 : vector<16x64xf32>
    %cst_107 = arith.constant 5.000000e-01 : f32
    %187 = vector.broadcast %cst_107 : f32 to vector<16x64xf32>
    %188 = arith.mulf %187, %186 : vector<16x64xf32>
    %cst_108 = arith.constant 0.707106769 : f32
    %189 = vector.broadcast %cst_108 : f32 to vector<16x64xf32>
    %190 = arith.mulf %186, %189 : vector<16x64xf32>
    %191 = math.erf %190 : vector<16x64xf32>
    %cst_109 = arith.constant 1.000000e+00 : f32
    %192 = vector.broadcast %cst_109 : f32 to vector<16x64xf32>
    %193 = arith.addf %192, %191 : vector<16x64xf32>
    %194 = arith.mulf %188, %193 : vector<16x64xf32>
    %c1_110 = arith.constant 1 : index
    %c0_111 = arith.constant 0 : index
    %c0_112 = arith.constant 0 : index
    %195 = vector.load %arg14[%c1_110, %c0_111, %c0_112] : memref<2x64x32xf32, #tpu.memory_space<vmem>>, vector<1x64x32xf32>
    %196 = vector.shape_cast %195 : vector<1x64x32xf32> to vector<64x32xf32>
    %cst_113 = arith.constant dense<0.000000e+00> : vector<16x32xf32>
    %197 = tpu.matmul %194, %196, %cst_113 {dimension_numbers = #tpu.dot_dimension_numbers<[1], [0], [0], [1], [0, 0, 1, 1], [], []>} : vector<16x64xf32>, vector<64x32xf32>, vector<16x32xf32> -> vector<16x32xf32>
    %c1_114 = arith.constant 1 : index
    %c0_115 = arith.constant 0 : index
    %c0_116 = arith.constant 0 : index
    %198 = vector.load %arg15[%c1_114, %c0_115, %c0_116] : memref<2x1x32xf32, #tpu.memory_space<vmem>>, vector<1x1x32xf32>
    %199 = vector.shape_cast %198 : vector<1x1x32xf32> to vector<1x32xf32>
    %200 = vector.broadcast %199 : vector<1x32xf32> to vector<16x32xf32>
    %201 = arith.addf %197, %200 : vector<16x32xf32>
    %202 = arith.addf %153, %201 : vector<16x32xf32>
    %c0_117 = arith.constant 0 : index
    %c0_118 = arith.constant 0 : index
    %203 = vector.load %arg16[%c0_117, %c0_118] : memref<1x32xf32, #tpu.memory_space<vmem>>, vector<1x32xf32>
    %c0_119 = arith.constant 0 : index
    %c0_120 = arith.constant 0 : index
    %204 = vector.load %arg17[%c0_119, %c0_120] : memref<1x32xf32, #tpu.memory_space<vmem>>, vector<1x32xf32>
    %cst_121 = arith.constant dense<0.000000e+00> : vector<16xf32>
    %205 = vector.multi_reduction <add>, %202, %cst_121 [1] : vector<16x32xf32> to vector<16xf32>
    %206 = vector.shape_cast %205 : vector<16xf32> to vector<16x1xf32>
    %cst_122 = arith.constant 3.200000e+01 : f32
    %207 = vector.broadcast %cst_122 : f32 to vector<16x1xf32>
    %208 = arith.divf %206, %207 : vector<16x1xf32>
    %209 = vector.broadcast %208 : vector<16x1xf32> to vector<16x32xf32>
    %210 = arith.subf %202, %209 : vector<16x32xf32>
    %211 = arith.mulf %210, %210 : vector<16x32xf32>
    %cst_123 = arith.constant dense<0.000000e+00> : vector<16xf32>
    %212 = vector.multi_reduction <add>, %211, %cst_123 [1] : vector<16x32xf32> to vector<16xf32>
    %213 = vector.shape_cast %212 : vector<16xf32> to vector<16x1xf32>
    %cst_124 = arith.constant 3.200000e+01 : f32
    %214 = vector.broadcast %cst_124 : f32 to vector<16x1xf32>
    %215 = arith.divf %213, %214 : vector<16x1xf32>
    %216 = vector.broadcast %208 : vector<16x1xf32> to vector<16x32xf32>
    %217 = arith.subf %202, %216 : vector<16x32xf32>
    %cst_125 = arith.constant 9.99999997E-7 : f32
    %218 = vector.broadcast %cst_125 : f32 to vector<16x1xf32>
    %219 = arith.addf %215, %218 : vector<16x1xf32>
    %220 = math.rsqrt %219 : vector<16x1xf32>
    %221 = vector.broadcast %220 : vector<16x1xf32> to vector<16x32xf32>
    %222 = arith.mulf %217, %221 : vector<16x32xf32>
    %223 = vector.broadcast %203 : vector<1x32xf32> to vector<16x32xf32>
    %224 = arith.mulf %222, %223 : vector<16x32xf32>
    %225 = vector.broadcast %204 : vector<1x32xf32> to vector<16x32xf32>
    %226 = arith.addf %224, %225 : vector<16x32xf32>
    %cst_126 = arith.constant dense<0.000000e+00> : vector<32xf32>
    %227 = vector.multi_reduction <add>, %226, %cst_126 [0] : vector<16x32xf32> to vector<32xf32>
    %228 = vector.shape_cast %227 : vector<32xf32> to vector<1x32xf32>
    %cst_127 = arith.constant 1.600000e+01 : f32
    %229 = vector.broadcast %cst_127 : f32 to vector<1x32xf32>
    %230 = arith.divf %228, %229 : vector<1x32xf32>
    %c0_128 = arith.constant 0 : index
    %c0_129 = arith.constant 0 : index
    %231 = vector.load %arg18[%c0_128, %c0_129] : memref<32x10xf32, #tpu.memory_space<vmem>>, vector<32x10xf32>
    %cst_130 = arith.constant dense<0.000000e+00> : vector<1x10xf32>
    %232 = tpu.matmul %230, %231, %cst_130 {dimension_numbers = #tpu.dot_dimension_numbers<[1], [0], [0], [1], [0, 0, 1, 1], [], []>} : vector<1x32xf32>, vector<32x10xf32>, vector<1x10xf32> -> vector<1x10xf32>
    %c0_131 = arith.constant 0 : index
    %c0_132 = arith.constant 0 : index
    %233 = vector.load %arg19[%c0_131, %c0_132] : memref<1x10xf32, #tpu.memory_space<vmem>>, vector<1x10xf32>
    %234 = arith.addf %232, %233 : vector<1x10xf32>
    %c0_133 = arith.constant 0 : index
    %c0_134 = arith.constant 0 : index
    %c0_135 = arith.constant 0 : index
    %235 = vector.load %arg20[%c0_133, %c0_134, %c0_135] : memref<1x1x10xf32, #tpu.memory_space<vmem>>, vector<1x1x10xf32>
    %236 = vector.shape_cast %235 : vector<1x1x10xf32> to vector<1x10xf32>
    %237 = vector.shape_cast %234 : vector<1x10xf32> to vector<1x1x10xf32>
    tpu.vector_store %arg20[%c0_133, %c0_134, %c0_135], %237 {strides = array<i32>} : memref<1x1x10xf32, #tpu.memory_space<vmem>>, vector<1x1x10xf32>,
    return
  }
  func.func @transform_0(%arg0: i32) -> (i32, i32, i32) {
    %c0_i32 = arith.constant 0 : i32
    %c0_i32_0 = arith.constant 0 : i32
    %c0_i32_1 = arith.constant 0 : i32
    return %arg0, %c0_i32, %c0_i32_0 : i32, i32, i32
  }
  func.func @transform_1(%arg0: i32) -> (i32, i32) {
    %c0_i32 = arith.constant 0 : i32
    %c0_i32_0 = arith.constant 0 : i32
    %c0_i32_1 = arith.constant 0 : i32
    return %c0_i32, %c0_i32_0 : i32, i32
  }
  func.func @transform_2(%arg0: i32) -> (i32, i32) {
    %c0_i32 = arith.constant 0 : i32
    %c0_i32_0 = arith.constant 0 : i32
    %c0_i32_1 = arith.constant 0 : i32
    return %c0_i32, %c0_i32_0 : i32, i32
  }
  func.func @transform_3(%arg0: i32) -> (i32, i32, i32) {
    %c0_i32 = arith.constant 0 : i32
    %c0_i32_0 = arith.constant 0 : i32
    %c0_i32_1 = arith.constant 0 : i32
    %c0_i32_2 = arith.constant 0 : i32
    return %c0_i32, %c0_i32_0, %c0_i32_1 : i32, i32, i32
  }
  func.func @transform_4(%arg0: i32) -> (i32, i32, i32) {
    %c0_i32 = arith.constant 0 : i32
    %c0_i32_0 = arith.constant 0 : i32
    %c0_i32_1 = arith.constant 0 : i32
    %c0_i32_2 = arith.constant 0 : i32
    return %c0_i32, %c0_i32_0, %c0_i32_1 : i32, i32, i32
  }
  func.func @transform_5(%arg0: i32) -> (i32, i32, i32) {
    %c0_i32 = arith.constant 0 : i32
    %c0_i32_0 = arith.constant 0 : i32
    %c0_i32_1 = arith.constant 0 : i32
    %c0_i32_2 = arith.constant 0 : i32
    return %c0_i32, %c0_i32_0, %c0_i32_1 : i32, i32, i32
  }
  func.func @transform_6(%arg0: i32) -> (i32, i32, i32) {
    %c0_i32 = arith.constant 0 : i32
    %c0_i32_0 = arith.constant 0 : i32
    %c0_i32_1 = arith.constant 0 : i32
    %c0_i32_2 = arith.constant 0 : i32
    return %c0_i32, %c0_i32_0, %c0_i32_1 : i32, i32, i32
  }
  func.func @transform_7(%arg0: i32) -> (i32, i32, i32) {
    %c0_i32 = arith.constant 0 : i32
    %c0_i32_0 = arith.constant 0 : i32
    %c0_i32_1 = arith.constant 0 : i32
    %c0_i32_2 = arith.constant 0 : i32
    return %c0_i32, %c0_i32_0, %c0_i32_1 : i32, i32, i32
  }
  func.func @transform_8(%arg0: i32) -> (i32, i32, i32) {
    %c0_i32 = arith.constant 0 : i32
    %c0_i32_0 = arith.constant 0 : i32
    %c0_i32_1 = arith.constant 0 : i32
    %c0_i32_2 = arith.constant 0 : i32
    return %c0_i32, %c0_i32_0, %c0_i32_1 : i32, i32, i32
  }
  func.func @transform_9(%arg0: i32) -> (i32, i32, i32) {
    %c0_i32 = arith.constant 0 : i32
    %c0_i32_0 = arith.constant 0 : i32
    %c0_i32_1 = arith.constant 0 : i32
    %c0_i32_2 = arith.constant 0 : i32
    return %c0_i32, %c0_i32_0, %c0_i32_1 : i32, i32, i32
  }
  func.func @transform_10(%arg0: i32) -> (i32, i32, i32) {
    %c0_i32 = arith.constant 0 : i32
    %c0_i32_0 = arith.constant 0 : i32
    %c0_i32_1 = arith.constant 0 : i32
    %c0_i32_2 = arith.constant 0 : i32
    return %c0_i32, %c0_i32_0, %c0_i32_1 : i32, i32, i32
  }
  func.func @transform_11(%arg0: i32) -> (i32, i32, i32) {
    %c0_i32 = arith.constant 0 : i32
    %c0_i32_0 = arith.constant 0 : i32
    %c0_i32_1 = arith.constant 0 : i32
    %c0_i32_2 = arith.constant 0 : i32
    return %c0_i32, %c0_i32_0, %c0_i32_1 : i32, i32, i32
  }
  func.func @transform_12(%arg0: i32) -> (i32, i32, i32) {
    %c0_i32 = arith.constant 0 : i32
    %c0_i32_0 = arith.constant 0 : i32
    %c0_i32_1 = arith.constant 0 : i32
    %c0_i32_2 = arith.constant 0 : i32
    return %c0_i32, %c0_i32_0, %c0_i32_1 : i32, i32, i32
  }
  func.func @transform_13(%arg0: i32) -> (i32, i32, i32) {
    %c0_i32 = arith.constant 0 : i32
    %c0_i32_0 = arith.constant 0 : i32
    %c0_i32_1 = arith.constant 0 : i32
    %c0_i32_2 = arith.constant 0 : i32
    return %c0_i32, %c0_i32_0, %c0_i32_1 : i32, i32, i32
  }
  func.func @transform_14(%arg0: i32) -> (i32, i32, i32) {
    %c0_i32 = arith.constant 0 : i32
    %c0_i32_0 = arith.constant 0 : i32
    %c0_i32_1 = arith.constant 0 : i32
    %c0_i32_2 = arith.constant 0 : i32
    return %c0_i32, %c0_i32_0, %c0_i32_1 : i32, i32, i32
  }
  func.func @transform_15(%arg0: i32) -> (i32, i32) {
    %c0_i32 = arith.constant 0 : i32
    %c0_i32_0 = arith.constant 0 : i32
    %c0_i32_1 = arith.constant 0 : i32
    return %c0_i32, %c0_i32_0 : i32, i32
  }
  func.func @transform_16(%arg0: i32) -> (i32, i32) {
    %c0_i32 = arith.constant 0 : i32
    %c0_i32_0 = arith.constant 0 : i32
    %c0_i32_1 = arith.constant 0 : i32
    return %c0_i32, %c0_i32_0 : i32, i32
  }
  func.func @transform_17(%arg0: i32) -> (i32, i32) {
    %c0_i32 = arith.constant 0 : i32
    %c0_i32_0 = arith.constant 0 : i32
    %c0_i32_1 = arith.constant 0 : i32
    return %c0_i32, %c0_i32_0 : i32, i32
  }
  func.func @transform_18(%arg0: i32) -> (i32, i32) {
    %c0_i32 = arith.constant 0 : i32
    %c0_i32_0 = arith.constant 0 : i32
    %c0_i32_1 = arith.constant 0 : i32
    return %c0_i32, %c0_i32_0 : i32, i32
  }
  func.func @transform_19(%arg0: i32) -> (i32, i32, i32) {
    %c0_i32 = arith.constant 0 : i32
    %c0_i32_0 = arith.constant 0 : i32
    %c0_i32_1 = arith.constant 0 : i32
    return %arg0, %c0_i32, %c0_i32_0 : i32, i32, i32
  }
}

</mosaic_0001>

<llo_original>
// kernel: tpu_custom_call.1
$region0: #{tpu_custom_call.1}
  #allocation0 [shape = 'u32[]', space=smem, size = 0x4, offset = 0x4, fixed_abs, tag = 'smem constant byte address 0x4 - core index']
  #allocation1 [shape = 'u32[144,128]{1,0:T(1,128)}', space=vmem, size = 0x12000, scoped, tag = 'internal scratch']
  %s0 = inlined_call_operand.vmem [shape: f32[2,16,192], index: 0, kind: input, shape index: {}]
  %s1 = inlined_call_operand.vmem [shape: f32[192,32], index: 1, kind: input, shape index: {}]
  %s2 = inlined_call_operand.vmem [shape: f32[1,32], index: 2, kind: input, shape index: {}]
  %s3 = inlined_call_operand.vmem [shape: f32[2,1,32], index: 3, kind: input, shape index: {}]
  %s4 = inlined_call_operand.vmem [shape: f32[2,1,32], index: 4, kind: input, shape index: {}]
  %s5 = inlined_call_operand.vmem [shape: f32[2,16,16], index: 5, kind: input, shape index: {}]
  %s6 = inlined_call_operand.vmem [shape: f32[2,1,16], index: 6, kind: input, shape index: {}]
  %s7 = inlined_call_operand.vmem [shape: f32[2,16,16], index: 7, kind: input, shape index: {}]
  %s8 = inlined_call_operand.vmem [shape: f32[2,16,1], index: 8, kind: input, shape index: {}]
  %s9 = inlined_call_operand.vmem [shape: f32[2,1,32], index: 9, kind: input, shape index: {}]
  %s10 = inlined_call_operand.vmem [shape: f32[2,1,32], index: 10, kind: input, shape index: {}]
  %s11 = inlined_call_operand.vmem [shape: f32[2,32,64], index: 11, kind: input, shape index: {}]
  %s12 = inlined_call_operand.vmem [shape: f32[2,1,64], index: 12, kind: input, shape index: {}]
  %s13 = inlined_call_operand.vmem [shape: f32[2,64,32], index: 13, kind: input, shape index: {}]
  %s14 = inlined_call_operand.vmem [shape: f32[2,1,32], index: 14, kind: input, shape index: {}]
  %s15 = inlined_call_operand.vmem [shape: f32[1,32], index: 15, kind: input, shape index: {}]
  %s16 = inlined_call_operand.vmem [shape: f32[1,32], index: 16, kind: input, shape index: {}]
  %s17 = inlined_call_operand.vmem [shape: f32[32,10], index: 17, kind: input, shape index: {}]
  %s18 = inlined_call_operand.vmem [shape: f32[1,10], index: 18, kind: input, shape index: {}]
  %s19 = inlined_call_operand.hbm [shape: f32[2,1,10], index: 19, kind: output, shape index: {}]
  %s20 = sld [smem:[#allocation0]]
  $region109: #{tpu_custom_call.1} parent=0
    _
  %s22 = ssub.s32 1, %s20
  %s23 = scalar_select 0, %s22, %s20
  $region1: #{tpu_custom_call.1} parent=0
    #allocation2 [shape = 'u8[1024]{0}', space=vmem, size = 0x400, scoped, tag = 'output window, operand 0']
    #allocation3 [shape = 's32[2]{0}', space=sflag, size = 0x8, scoped, tag = 'scoped memory for tpu_custom_call.1']
    %24 = vsyncpa [#allocation3], 0
    %s25 = scalar_lea.sflag [#allocation3], 1
    %26 = vsyncpa %s25, 0
    loop: start=0, step=1, limit=4
    $region2: #{tpu_custom_call.1} parent=1 // loop_pre_header
      _
    $region3: #{tpu_custom_call.1} parent=1 // loop_header
      %s28 = sphi 0, %s32
      %p29 = scmp.ge.s32.totalorder %s28, 4
      %s38 = sphi 0, %s40
      %s41 = sphi 0, %s38
      %s42 = sphi 0, %s41
      %s58 = sphi 0, %s42
      %s62 = sphi 0, %s62
      %s64 = sphi 0, %s62
      %s65 = sphi 0, %s64
      %s79 = sphi 0, %s65
      %s83 = sphi 0, %s83
      %s85 = sphi 0, %s83
      %s86 = sphi 0, %s85
      %s100 = sphi 0, %s86
      %s104 = sphi 0, %s104
      %s106 = sphi 0, %s104
      %s107 = sphi 0, %s106
      %s121 = sphi 0, %s107
      %s125 = sphi 0, %s125
      %s127 = sphi 0, %s125
      %s128 = sphi 0, %s127
      %s142 = sphi 0, %s128
      %s146 = sphi 0, %s146
      %s148 = sphi 0, %s146
      %s149 = sphi 0, %s148
      %s163 = sphi 0, %s149
      %s167 = sphi 0, %s167
      %s169 = sphi 0, %s167
      %s170 = sphi 0, %s169
      %s184 = sphi 0, %s170
      %s188 = sphi 0, %s188
      %s190 = sphi 0, %s188
      %s191 = sphi 0, %s190
      %s205 = sphi 0, %s191
      %s209 = sphi 0, %s209
      %s211 = sphi 0, %s209
      %s212 = sphi 0, %s211
      %s226 = sphi 0, %s212
      %s230 = sphi 0, %s230
      %s232 = sphi 0, %s230
      %s233 = sphi 0, %s232
      %s247 = sphi 0, %s233
      %s251 = sphi 0, %s251
      %s253 = sphi 0, %s251
      %s254 = sphi 0, %s253
      %s268 = sphi 0, %s254
      %s272 = sphi 0, %s272
      %s274 = sphi 0, %s272
      %s275 = sphi 0, %s274
      %s289 = sphi 0, %s275
      %s293 = sphi 0, %s293
      %s295 = sphi 0, %s293
      %s296 = sphi 0, %s295
      %s310 = sphi 0, %s296
      %s314 = sphi 0, %s314
      %s316 = sphi 0, %s314
      %s317 = sphi 0, %s316
      %s331 = sphi 0, %s317
      %s335 = sphi 0, %s335
      %s337 = sphi 0, %s335
      %s338 = sphi 0, %s337
      %s352 = sphi 0, %s338
      %s356 = sphi 0, %s356
      %s358 = sphi 0, %s356
      %s359 = sphi 0, %s358
      %s373 = sphi 0, %s359
      %s377 = sphi 0, %s377
      %s379 = sphi 0, %s377
      %s380 = sphi 0, %s379
      %s394 = sphi 0, %s380
      %s398 = sphi 0, %s398
      %s400 = sphi 0, %s398
      %s401 = sphi 0, %s400
      %s415 = sphi 0, %s401
      %s419 = sphi 0, %s419
      %s421 = sphi 0, %s419
      %s422 = sphi 0, %s421
      %s436 = sphi 0, %s422
      %s442 = sphi 0, %s444
      %s445 = sphi 0, %s442
      %s446 = sphi 0, %s445
      %s462 = sphi 0, %s446
    $region4: #{tpu_custom_call.1} parent=1 // loop_header_branch
      %31 = sbr.rel (%p29) target = $region8
    $region5: #{tpu_custom_call.1} parent=1 // loop_body
      %s33 = ssub.s32 %s28, 1
      %s34 = ssub.s32 %s28, 2
      %s35 = sadd.s32 %s28, 1
      %s36 = ssub.s32 %s28, %s35
      %p37 = scmp.eq.s32.totalorder %s36, 0
      %s39 = sadd.s32 %s38, 1
      %s40 = scalar_select %p37, %s38, %s39
      %p43 = pneg %p37
      %p44 = scmp.eq.s32.totalorder %s28, 1
      %p45 = por %p43, %p44
      %p46 = scmp.ne.s32.totalorder %s38, %s41
      %p47 = scmp.eq.s32.totalorder %s28, 0
      %p48 = por %p46, %p47
      %p49 = scmp.ne.s32.totalorder %s38, %s41
      %p50 = scmp.eq.s32.totalorder %s33, 1
      %p51 = por %p49, %p50
      %p52 = scmp.ne.s32.totalorder %s41, %s42
      %p53 = scmp.eq.s32.totalorder %s33, 0
      %p54 = por %p52, %p53
      %p55 = scmp.ne.s32.totalorder %s41, %s42
      %p56 = scmp.eq.s32.totalorder %s34, 1
      %p57 = por %p55, %p56
      %p59 = scmp.ne.s32.totalorder %s42, %s58
      %p60 = scmp.eq.s32.totalorder %s34, 0
      %p61 = por %p59, %p60
      %s63 = sadd.s32 %s62, 1
      %p66 = scmp.eq.s32.totalorder %s28, 1
      %p67 = scmp.ne.s32.totalorder %s62, %s64
      %p68 = scmp.eq.s32.totalorder %s28, 0
      %p69 = por %p67, %p68
      %p70 = scmp.ne.s32.totalorder %s62, %s64
      %p71 = scmp.eq.s32.totalorder %s33, 1
      %p72 = por %p70, %p71
      %p73 = scmp.ne.s32.totalorder %s64, %s65
      %p74 = scmp.eq.s32.totalorder %s33, 0
      %p75 = por %p73, %p74
      %p76 = scmp.ne.s32.totalorder %s64, %s65
      %p77 = scmp.eq.s32.totalorder %s34, 1
      %p78 = por %p76, %p77
      %p80 = scmp.ne.s32.totalorder %s65, %s79
      %p81 = scmp.eq.s32.totalorder %s34, 0
      %p82 = por %p80, %p81
      %s84 = sadd.s32 %s83, 1
      %p87 = scmp.eq.s32.totalorder %s28, 1
      %p88 = scmp.ne.s32.totalorder %s83, %s85
      %p89 = scmp.eq.s32.totalorder %s28, 0
      %p90 = por %p88, %p89
      %p91 = scmp.ne.s32.totalorder %s83, %s85
      %p92 = scmp.eq.s32.totalorder %s33, 1
      %p93 = por %p91, %p92
      %p94 = scmp.ne.s32.totalorder %s85, %s86
      %p95 = scmp.eq.s32.totalorder %s33, 0
      %p96 = por %p94, %p95
      %p97 = scmp.ne.s32.totalorder %s85, %s86
      %p98 = scmp.eq.s32.totalorder %s34, 1
      %p99 = por %p97, %p98
      %p101 = scmp.ne.s32.totalorder %s86, %s100
      %p102 = scmp.eq.s32.totalorder %s34, 0
      %p103 = por %p101, %p102
      %s105 = sadd.s32 %s104, 1
      %p108 = scmp.eq.s32.totalorder %s28, 1
      %p109 = scmp.ne.s32.totalorder %s104, %s106
      %p110 = scmp.eq.s32.totalorder %s28, 0
      %p111 = por %p109, %p110
      %p112 = scmp.ne.s32.totalorder %s104, %s106
      %p113 = scmp.eq.s32.totalorder %s33, 1
      %p114 = por %p112, %p113
      %p115 = scmp.ne.s32.totalorder %s106, %s107
      %p116 = scmp.eq.s32.totalorder %s33, 0
      %p117 = por %p115, %p116
      %p118 = scmp.ne.s32.totalorder %s106, %s107
      %p119 = scmp.eq.s32.totalorder %s34, 1
      %p120 = por %p118, %p119
      %p122 = scmp.ne.s32.totalorder %s107, %s121
      %p123 = scmp.eq.s32.totalorder %s34, 0
      %p124 = por %p122, %p123
      %s126 = sadd.s32 %s125, 1
      %p129 = scmp.eq.s32.totalorder %s28, 1
      %p130 = scmp.ne.s32.totalorder %s125, %s127
      %p131 = scmp.eq.s32.totalorder %s28, 0
      %p132 = por %p130, %p131
      %p133 = scmp.ne.s32.totalorder %s125, %s127
      %p134 = scmp.eq.s32.totalorder %s33, 1
      %p135 = por %p133, %p134
      %p136 = scmp.ne.s32.totalorder %s127, %s128
      %p137 = scmp.eq.s32.totalorder %s33, 0
      %p138 = por %p136, %p137
      %p139 = scmp.ne.s32.totalorder %s127, %s128
      %p140 = scmp.eq.s32.totalorder %s34, 1
      %p141 = por %p139, %p140
      %p143 = scmp.ne.s32.totalorder %s128, %s142
      %p144 = scmp.eq.s32.totalorder %s34, 0
      %p145 = por %p143, %p144
      %s147 = sadd.s32 %s146, 1
      %p150 = scmp.eq.s32.totalorder %s28, 1
      %p151 = scmp.ne.s32.totalorder %s146, %s148
      %p152 = scmp.eq.s32.totalorder %s28, 0
      %p153 = por %p151, %p152
      %p154 = scmp.ne.s32.totalorder %s146, %s148
      %p155 = scmp.eq.s32.totalorder %s33, 1
      %p156 = por %p154, %p155
      %p157 = scmp.ne.s32.totalorder %s148, %s149
      %p158 = scmp.eq.s32.totalorder %s33, 0
      %p159 = por %p157, %p158
      %p160 = scmp.ne.s32.totalorder %s148, %s149
      %p161 = scmp.eq.s32.totalorder %s34, 1
      %p162 = por %p160, %p161
      %p164 = scmp.ne.s32.totalorder %s149, %s163
      %p165 = scmp.eq.s32.totalorder %s34, 0
      %p166 = por %p164, %p165
      %s168 = sadd.s32 %s167, 1
      %p171 = scmp.eq.s32.totalorder %s28, 1
      %p172 = scmp.ne.s32.totalorder %s167, %s169
      %p173 = scmp.eq.s32.totalorder %s28, 0
      %p174 = por %p172, %p173
      %p175 = scmp.ne.s32.totalorder %s167, %s169
      %p176 = scmp.eq.s32.totalorder %s33, 1
      %p177 = por %p175, %p176
      %p178 = scmp.ne.s32.totalorder %s169, %s170
      %p179 = scmp.eq.s32.totalorder %s33, 0
      %p180 = por %p178, %p179
      %p181 = scmp.ne.s32.totalorder %s169, %s170
      %p182 = scmp.eq.s32.totalorder %s34, 1
      %p183 = por %p181, %p182
      %p185 = scmp.ne.s32.totalorder %s170, %s184
      %p186 = scmp.eq.s32.totalorder %s34, 0
      %p187 = por %p185, %p186
      %s189 = sadd.s32 %s188, 1
      %p192 = scmp.eq.s32.totalorder %s28, 1
      %p193 = scmp.ne.s32.totalorder %s188, %s190
      %p194 = scmp.eq.s32.totalorder %s28, 0
      %p195 = por %p193, %p194
      %p196 = scmp.ne.s32.totalorder %s188, %s190
      %p197 = scmp.eq.s32.totalorder %s33, 1
      %p198 = por %p196, %p197
      %p199 = scmp.ne.s32.totalorder %s190, %s191
      %p200 = scmp.eq.s32.totalorder %s33, 0
      %p201 = por %p199, %p200
      %p202 = scmp.ne.s32.totalorder %s190, %s191
      %p203 = scmp.eq.s32.totalorder %s34, 1
      %p204 = por %p202, %p203
      %p206 = scmp.ne.s32.totalorder %s191, %s205
      %p207 = scmp.eq.s32.totalorder %s34, 0
      %p208 = por %p206, %p207
      %s210 = sadd.s32 %s209, 1
      %p213 = scmp.eq.s32.totalorder %s28, 1
      %p214 = scmp.ne.s32.totalorder %s209, %s211
      %p215 = scmp.eq.s32.totalorder %s28, 0
      %p216 = por %p214, %p215
      %p217 = scmp.ne.s32.totalorder %s209, %s211
      %p218 = scmp.eq.s32.totalorder %s33, 1
      %p219 = por %p217, %p218
      %p220 = scmp.ne.s32.totalorder %s211, %s212
      %p221 = scmp.eq.s32.totalorder %s33, 0
      %p222 = por %p220, %p221
      %p223 = scmp.ne.s32.totalorder %s211, %s212
      %p224 = scmp.eq.s32.totalorder %s34, 1
      %p225 = por %p223, %p224
      %p227 = scmp.ne.s32.totalorder %s212, %s226
      %p228 = scmp.eq.s32.totalorder %s34, 0
      %p229 = por %p227, %p228
      %s231 = sadd.s32 %s230, 1
      %p234 = scmp.eq.s32.totalorder %s28, 1
      %p235 = scmp.ne.s32.totalorder %s230, %s232
      %p236 = scmp.eq.s32.totalorder %s28, 0
      %p237 = por %p235, %p236
      %p238 = scmp.ne.s32.totalorder %s230, %s232
      %p239 = scmp.eq.s32.totalorder %s33, 1
      %p240 = por %p238, %p239
      %p241 = scmp.ne.s32.totalorder %s232, %s233
      %p242 = scmp.eq.s32.totalorder %s33, 0
      %p243 = por %p241, %p242
      %p244 = scmp.ne.s32.totalorder %s232, %s233
      %p245 = scmp.eq.s32.totalorder %s34, 1
      %p246 = por %p244, %p245
      %p248 = scmp.ne.s32.totalorder %s233, %s247
      %p249 = scmp.eq.s32.totalorder %s34, 0
      %p250 = por %p248, %p249
      %s252 = sadd.s32 %s251, 1
      %p255 = scmp.eq.s32.totalorder %s28, 1
      %p256 = scmp.ne.s32.totalorder %s251, %s253
      %p257 = scmp.eq.s32.totalorder %s28, 0
      %p258 = por %p256, %p257
      %p259 = scmp.ne.s32.totalorder %s251, %s253
      %p260 = scmp.eq.s32.totalorder %s33, 1
      %p261 = por %p259, %p260
      %p262 = scmp.ne.s32.totalorder %s253, %s254
      %p263 = scmp.eq.s32.totalorder %s33, 0
      %p264 = por %p262, %p263
      %p265 = scmp.ne.s32.totalorder %s253, %s254
      %p266 = scmp.eq.s32.totalorder %s34, 1
      %p267 = por %p265, %p266
      %p269 = scmp.ne.s32.totalorder %s254, %s268
      %p270 = scmp.eq.s32.totalorder %s34, 0
      %p271 = por %p269, %p270
      %s273 = sadd.s32 %s272, 1
      %p276 = scmp.eq.s32.totalorder %s28, 1
      %p277 = scmp.ne.s32.totalorder %s272, %s274
      %p278 = scmp.eq.s32.totalorder %s28, 0
      %p279 = por %p277, %p278
      %p280 = scmp.ne.s32.totalorder %s272, %s274
      %p281 = scmp.eq.s32.totalorder %s33, 1
      %p282 = por %p280, %p281
      %p283 = scmp.ne.s32.totalorder %s274, %s275
      %p284 = scmp.eq.s32.totalorder %s33, 0
      %p285 = por %p283, %p284
      %p286 = scmp.ne.s32.totalorder %s274, %s275
      %p287 = scmp.eq.s32.totalorder %s34, 1
      %p288 = por %p286, %p287
      %p290 = scmp.ne.s32.totalorder %s275, %s289
      %p291 = scmp.eq.s32.totalorder %s34, 0
      %p292 = por %p290, %p291
      %s294 = sadd.s32 %s293, 1
      %p297 = scmp.eq.s32.totalorder %s28, 1
      %p298 = scmp.ne.s32.totalorder %s293, %s295
      %p299 = scmp.eq.s32.totalorder %s28, 0
      %p300 = por %p298, %p299
      %p301 = scmp.ne.s32.totalorder %s293, %s295
      %p302 = scmp.eq.s32.totalorder %s33, 1
      %p303 = por %p301, %p302
      %p304 = scmp.ne.s32.totalorder %s295, %s296
      %p305 = scmp.eq.s32.totalorder %s33, 0
      %p306 = por %p304, %p305
      %p307 = scmp.ne.s32.totalorder %s295, %s296
      %p308 = scmp.eq.s32.totalorder %s34, 1
      %p309 = por %p307, %p308
      %p311 = scmp.ne.s32.totalorder %s296, %s310
      %p312 = scmp.eq.s32.totalorder %s34, 0
      %p313 = por %p311, %p312
      %s315 = sadd.s32 %s314, 1
      %p318 = scmp.eq.s32.totalorder %s28, 1
      %p319 = scmp.ne.s32.totalorder %s314, %s316
      %p320 = scmp.eq.s32.totalorder %s28, 0
      %p321 = por %p319, %p320
      %p322 = scmp.ne.s32.totalorder %s314, %s316
      %p323 = scmp.eq.s32.totalorder %s33, 1
      %p324 = por %p322, %p323
      %p325 = scmp.ne.s32.totalorder %s316, %s317
      %p326 = scmp.eq.s32.totalorder %s33, 0
      %p327 = por %p325, %p326
      %p328 = scmp.ne.s32.totalorder %s316, %s317
      %p329 = scmp.eq.s32.totalorder %s34, 1
      %p330 = por %p328, %p329
      %p332 = scmp.ne.s32.totalorder %s317, %s331
      %p333 = scmp.eq.s32.totalorder %s34, 0
      %p334 = por %p332, %p333
      %s336 = sadd.s32 %s335, 1
      %p339 = scmp.eq.s32.totalorder %s28, 1
      %p340 = scmp.ne.s32.totalorder %s335, %s337
      %p341 = scmp.eq.s32.totalorder %s28, 0
      %p342 = por %p340, %p341
      %p343 = scmp.ne.s32.totalorder %s335, %s337
      %p344 = scmp.eq.s32.totalorder %s33, 1
      %p345 = por %p343, %p344
      %p346 = scmp.ne.s32.totalorder %s337, %s338
      %p347 = scmp.eq.s32.totalorder %s33, 0
      %p348 = por %p346, %p347
      %p349 = scmp.ne.s32.totalorder %s337, %s338
      %p350 = scmp.eq.s32.totalorder %s34, 1
      %p351 = por %p349, %p350
      %p353 = scmp.ne.s32.totalorder %s338, %s352
      %p354 = scmp.eq.s32.totalorder %s34, 0
      %p355 = por %p353, %p354
      %s357 = sadd.s32 %s356, 1
      %p360 = scmp.eq.s32.totalorder %s28, 1
      %p361 = scmp.ne.s32.totalorder %s356, %s358
      %p362 = scmp.eq.s32.totalorder %s28, 0
      %p363 = por %p361, %p362
      %p364 = scmp.ne.s32.totalorder %s356, %s358
      %p365 = scmp.eq.s32.totalorder %s33, 1
      %p366 = por %p364, %p365
      %p367 = scmp.ne.s32.totalorder %s358, %s359
      %p368 = scmp.eq.s32.totalorder %s33, 0
      %p369 = por %p367, %p368
      %p370 = scmp.ne.s32.totalorder %s358, %s359
      %p371 = scmp.eq.s32.totalorder %s34, 1
      %p372 = por %p370, %p371
      %p374 = scmp.ne.s32.totalorder %s359, %s373
      %p375 = scmp.eq.s32.totalorder %s34, 0
      %p376 = por %p374, %p375
      %s378 = sadd.s32 %s377, 1
      %p381 = scmp.eq.s32.totalorder %s28, 1
      %p382 = scmp.ne.s32.totalorder %s377, %s379
      %p383 = scmp.eq.s32.totalorder %s28, 0
      %p384 = por %p382, %p383
      %p385 = scmp.ne.s32.totalorder %s377, %s379
      %p386 = scmp.eq.s32.totalorder %s33, 1
      %p387 = por %p385, %p386
      %p388 = scmp.ne.s32.totalorder %s379, %s380
      %p389 = scmp.eq.s32.totalorder %s33, 0
      %p390 = por %p388, %p389
      %p391 = scmp.ne.s32.totalorder %s379, %s380
      %p392 = scmp.eq.s32.totalorder %s34, 1
      %p393 = por %p391, %p392
      %p395 = scmp.ne.s32.totalorder %s380, %s394
      %p396 = scmp.eq.s32.totalorder %s34, 0
      %p397 = por %p395, %p396
      %s399 = sadd.s32 %s398, 1
      %p402 = scmp.eq.s32.totalorder %s28, 1
      %p403 = scmp.ne.s32.totalorder %s398, %s400
      %p404 = scmp.eq.s32.totalorder %s28, 0
      %p405 = por %p403, %p404
      %p406 = scmp.ne.s32.totalorder %s398, %s400
      %p407 = scmp.eq.s32.totalorder %s33, 1
      %p408 = por %p406, %p407
      %p409 = scmp.ne.s32.totalorder %s400, %s401
      %p410 = scmp.eq.s32.totalorder %s33, 0
      %p411 = por %p409, %p410
      %p412 = scmp.ne.s32.totalorder %s400, %s401
      %p413 = scmp.eq.s32.totalorder %s34, 1
      %p414 = por %p412, %p413
      %p416 = scmp.ne.s32.totalorder %s401, %s415
      %p417 = scmp.eq.s32.totalorder %s34, 0
      %p418 = por %p416, %p417
      %s420 = sadd.s32 %s419, 1
      %p423 = scmp.eq.s32.totalorder %s28, 1
      %p424 = scmp.ne.s32.totalorder %s419, %s421
      %p425 = scmp.eq.s32.totalorder %s28, 0
      %p426 = por %p424, %p425
      %p427 = scmp.ne.s32.totalorder %s419, %s421
      %p428 = scmp.eq.s32.totalorder %s33, 1
      %p429 = por %p427, %p428
      %p430 = scmp.ne.s32.totalorder %s421, %s422
      %p431 = scmp.eq.s32.totalorder %s33, 0
      %p432 = por %p430, %p431
      %p433 = scmp.ne.s32.totalorder %s421, %s422
      %p434 = scmp.eq.s32.totalorder %s34, 1
      %p435 = por %p433, %p434
      %p437 = scmp.ne.s32.totalorder %s422, %s436
      %p438 = scmp.eq.s32.totalorder %s34, 0
      %p439 = por %p437, %p438
      %s440 = ssub.s32 %s28, %s35
      %p441 = scmp.eq.s32.totalorder %s440, 0
      %s443 = sadd.s32 %s442, 1
      %s444 = scalar_select %p441, %s442, %s443
      %p447 = pneg %p441
      %p448 = scmp.eq.s32.totalorder %s28, 1
      %p449 = por %p447, %p448
      %p450 = scmp.ne.s32.totalorder %s442, %s445
      %p451 = scmp.eq.s32.totalorder %s28, 0
      %p452 = por %p450, %p451
      %p453 = scmp.ne.s32.totalorder %s442, %s445
      %p454 = scmp.eq.s32.totalorder %s33, 1
      %p455 = por %p453, %p454
      %p456 = scmp.ne.s32.totalorder %s445, %s446
      %p457 = scmp.eq.s32.totalorder %s33, 0
      %p458 = por %p456, %p457
      %p459 = scmp.ne.s32.totalorder %s445, %s446
      %p460 = scmp.eq.s32.totalorder %s34, 1
      %p461 = por %p459, %p460
      %p463 = scmp.ne.s32.totalorder %s446, %s462
      %p464 = scmp.eq.s32.totalorder %s34, 0
      %p465 = por %p463, %p464
      %p466 = scmp.le.s32.totalorder 1, %s28
      %p467 = scmp.lt.s32.totalorder %s28, 3
      %p468 = pnand %p466, %p467
      %p469 = pneg %p468
      // Predicated region
      $region9: #{tpu_custom_call.1} parent=5 // pred_check
        _
      $region10: #{tpu_custom_call.1} parent=5 // pred_check_branch
        %471 = sbr.rel (%p468) target = $region12
      $region11: #{tpu_custom_call.1} parent=5 // pred_region
        %s472 = ssub.s32 %s28, 1
        // Predicated region
        $region13: #{tpu_custom_call.1} parent=11 // pred_check
          %p473 = pneg %p75
        $region14: #{tpu_custom_call.1} parent=11 // pred_check_branch
          %475 = sbr.rel (%p473) target = $region16
        $region15: #{tpu_custom_call.1} parent=11 // pred_region
          _
        $region16: #{tpu_custom_call.1} parent=11 // pred_fallthru
          _
        // Predicated region
        $region17: #{tpu_custom_call.1} parent=11 // pred_check
          %p476 = pneg %p96
        $region18: #{tpu_custom_call.1} parent=11 // pred_check_branch
          %478 = sbr.rel (%p476) target = $region20
        $region19: #{tpu_custom_call.1} parent=11 // pred_region
          _
        $region20: #{tpu_custom_call.1} parent=11 // pred_fallthru
          _
        // Predicated region
        $region21: #{tpu_custom_call.1} parent=11 // pred_check
          %p479 = pneg %p117
        $region22: #{tpu_custom_call.1} parent=11 // pred_check_branch
          %481 = sbr.rel (%p479) target = $region24
        $region23: #{tpu_custom_call.1} parent=11 // pred_region
          _
        $region24: #{tpu_custom_call.1} parent=11 // pred_fallthru
          _
        // Predicated region
        $region25: #{tpu_custom_call.1} parent=11 // pred_check
          %p482 = pneg %p138
        $region26: #{tpu_custom_call.1} parent=11 // pred_check_branch
          %484 = sbr.rel (%p482) target = $region28
        $region27: #{tpu_custom_call.1} parent=11 // pred_region
          _
        $region28: #{tpu_custom_call.1} parent=11 // pred_fallthru
          _
        // Predicated region
        $region29: #{tpu_custom_call.1} parent=11 // pred_check
          %p485 = pneg %p159
        $region30: #{tpu_custom_call.1} parent=11 // pred_check_branch
          %487 = sbr.rel (%p485) target = $region32
        $region31: #{tpu_custom_call.1} parent=11 // pred_region
          _
        $region32: #{tpu_custom_call.1} parent=11 // pred_fallthru
          _
        // Predicated region
        $region33: #{tpu_custom_call.1} parent=11 // pred_check
          %p488 = pneg %p180
        $region34: #{tpu_custom_call.1} parent=11 // pred_check_branch
          %490 = sbr.rel (%p488) target = $region36
        $region35: #{tpu_custom_call.1} parent=11 // pred_region
          _
        $region36: #{tpu_custom_call.1} parent=11 // pred_fallthru
          _
        // Predicated region
        $region37: #{tpu_custom_call.1} parent=11 // pred_check
          %p491 = pneg %p201
        $region38: #{tpu_custom_call.1} parent=11 // pred_check_branch
          %493 = sbr.rel (%p491) target = $region40
        $region39: #{tpu_custom_call.1} parent=11 // pred_region
          _
        $region40: #{tpu_custom_call.1} parent=11 // pred_fallthru
          _
        // Predicated region
        $region41: #{tpu_custom_call.1} parent=11 // pred_check
          %p494 = pneg %p222
        $region42: #{tpu_custom_call.1} parent=11 // pred_check_branch
          %496 = sbr.rel (%p494) target = $region44
        $region43: #{tpu_custom_call.1} parent=11 // pred_region
          _
        $region44: #{tpu_custom_call.1} parent=11 // pred_fallthru
          _
        // Predicated region
        $region45: #{tpu_custom_call.1} parent=11 // pred_check
          %p497 = pneg %p243
        $region46: #{tpu_custom_call.1} parent=11 // pred_check_branch
          %499 = sbr.rel (%p497) target = $region48
        $region47: #{tpu_custom_call.1} parent=11 // pred_region
          _
        $region48: #{tpu_custom_call.1} parent=11 // pred_fallthru
          _
        // Predicated region
        $region49: #{tpu_custom_call.1} parent=11 // pred_check
          %p500 = pneg %p264
        $region50: #{tpu_custom_call.1} parent=11 // pred_check_branch
          %502 = sbr.rel (%p500) target = $region52
        $region51: #{tpu_custom_call.1} parent=11 // pred_region
          _
        $region52: #{tpu_custom_call.1} parent=11 // pred_fallthru
          _
        // Predicated region
        $region53: #{tpu_custom_call.1} parent=11 // pred_check
          %p503 = pneg %p285
        $region54: #{tpu_custom_call.1} parent=11 // pred_check_branch
          %505 = sbr.rel (%p503) target = $region56
        $region55: #{tpu_custom_call.1} parent=11 // pred_region
          _
        $region56: #{tpu_custom_call.1} parent=11 // pred_fallthru
          _
        // Predicated region
        $region57: #{tpu_custom_call.1} parent=11 // pred_check
          %p506 = pneg %p306
        $region58: #{tpu_custom_call.1} parent=11 // pred_check_branch
          %508 = sbr.rel (%p506) target = $region60
        $region59: #{tpu_custom_call.1} parent=11 // pred_region
          _
        $region60: #{tpu_custom_call.1} parent=11 // pred_fallthru
          _
        // Predicated region
        $region61: #{tpu_custom_call.1} parent=11 // pred_check
          %p509 = pneg %p327
        $region62: #{tpu_custom_call.1} parent=11 // pred_check_branch
          %511 = sbr.rel (%p509) target = $region64
        $region63: #{tpu_custom_call.1} parent=11 // pred_region
          _
        $region64: #{tpu_custom_call.1} parent=11 // pred_fallthru
          _
        // Predicated region
        $region65: #{tpu_custom_call.1} parent=11 // pred_check
          %p512 = pneg %p348
        $region66: #{tpu_custom_call.1} parent=11 // pred_check_branch
          %514 = sbr.rel (%p512) target = $region68
        $region67: #{tpu_custom_call.1} parent=11 // pred_region
          _
        $region68: #{tpu_custom_call.1} parent=11 // pred_fallthru
          _
        // Predicated region
        $region69: #{tpu_custom_call.1} parent=11 // pred_check
          %p515 = pneg %p369
        $region70: #{tpu_custom_call.1} parent=11 // pred_check_branch
          %517 = sbr.rel (%p515) target = $region72
        $region71: #{tpu_custom_call.1} parent=11 // pred_region
          _
        $region72: #{tpu_custom_call.1} parent=11 // pred_fallthru
          _
        // Predicated region
        $region73: #{tpu_custom_call.1} parent=11 // pred_check
          %p518 = pneg %p390
        $region74: #{tpu_custom_call.1} parent=11 // pred_check_branch
          %520 = sbr.rel (%p518) target = $region76
        $region75: #{tpu_custom_call.1} parent=11 // pred_region
          _
        $region76: #{tpu_custom_call.1} parent=11 // pred_fallthru
          _
        // Predicated region
        $region77: #{tpu_custom_call.1} parent=11 // pred_check
          %p521 = pneg %p411
        $region78: #{tpu_custom_call.1} parent=11 // pred_check_branch
          %523 = sbr.rel (%p521) target = $region80
        $region79: #{tpu_custom_call.1} parent=11 // pred_region
          _
        $region80: #{tpu_custom_call.1} parent=11 // pred_fallthru
          _
        // Predicated region
        $region81: #{tpu_custom_call.1} parent=11 // pred_check
          %p524 = pneg %p432
        $region82: #{tpu_custom_call.1} parent=11 // pred_check_branch
          %526 = sbr.rel (%p524) target = $region84
        $region83: #{tpu_custom_call.1} parent=11 // pred_region
          _
        $region84: #{tpu_custom_call.1} parent=11 // pred_fallthru
          _
      $region12: #{tpu_custom_call.1} parent=5 // pred_fallthru
        _
      %p527 = scmp.lt.s32.totalorder %s28, 2
      // Predicated region
      $region85: #{tpu_custom_call.1} parent=5 // pred_check
        %p528 = pneg %p527
      $region86: #{tpu_custom_call.1} parent=5 // pred_check_branch
        %530 = sbr.rel (%p528) target = $region88
      $region87: #{tpu_custom_call.1} parent=5 // pred_region
        // Predicated region
        $region89: #{tpu_custom_call.1} parent=87 // pred_check
          %p531 = pneg %p48
        $region90: #{tpu_custom_call.1} parent=87 // pred_check_branch
          %533 = sbr.rel (%p531) target = $region92
        $region91: #{tpu_custom_call.1} parent=87 // pred_region
          %p534 = scmp.lt.s32.totalorder %s28, 1
          %s535 = scalar_select %p534, %s28, 1
          %s536 = smul.addr %s535, 4
          %s537 = smul.addr %s536, 8
          %s538 = scalar_lea.vmem %s0, %s537
        $region92: #{tpu_custom_call.1} parent=87 // pred_fallthru
          _
      $region88: #{tpu_custom_call.1} parent=5 // pred_fallthru
        _
      %p539 = scmp.le.s32.totalorder 1, %s28
      %p540 = scmp.lt.s32.totalorder %s28, 3
      %p541 = pnand %p539, %p540
      %p542 = pneg %p541
      // Predicated region
      $region93: #{tpu_custom_call.1} parent=5 // pred_check
        _
      $region94: #{tpu_custom_call.1} parent=5 // pred_check_branch
        %544 = sbr.rel (%p541) target = $region96
      $region95: #{tpu_custom_call.1} parent=5 // pred_region
        %s545 = ssub.s32 %s28, 1
        %p546 = scmp.lt.s32.totalorder %s33, 1
        %s547 = scalar_select %p546, %s33, 1
        %s548 = smul.addr %s547, 4
        %s549 = smul.addr %s548, 8
        %s550 = scalar_lea.vmem %s0, %s549
        %p551 = pneg %p54
        %p552 = pneg %p51
        %p553 = pneg %p75
        %p554 = pneg %p72
        %p555 = pneg %p96
        %p556 = pneg %p93
        %p557 = pneg %p117
        %p558 = pneg %p114
        %p559 = pneg %p138
        %p560 = pneg %p135
        %p561 = pneg %p159
        %p562 = pneg %p156
        %p563 = pneg %p180
        %p564 = pneg %p177
        %p565 = pneg %p201
        %p566 = pneg %p198
        %p567 = pneg %p222
        %p568 = pneg %p219
        %p569 = pneg %p243
        %p570 = pneg %p240
        %p571 = pneg %p264
        %p572 = pneg %p261
        %p573 = pneg %p285
        %p574 = pneg %p282
        %p575 = pneg %p306
        %p576 = pneg %p303
        %p577 = pneg %p327
        %p578 = pneg %p324
        %p579 = pneg %p348
        %p580 = pneg %p345
        %p581 = pneg %p369
        %p582 = pneg %p366
        %p583 = pneg %p390
        %p584 = pneg %p387
        %p585 = pneg %p411
        %p586 = pneg %p408
        %p587 = pneg %p432
        %p588 = pneg %p429
        %p589 = pneg %p458
        %p590 = pneg %p455
        %s591 = sand.u32 %s445, 1
        %s592 = scalar_lea.sflag [#allocation3], %s591
        %s593 = sand.u32 %s445, 1
        %s594 = scalar_lea.vmem [#allocation2], %s593
        %p595 = scmp.lt.s32.totalorder %s33, 1
        %s596 = scalar_select %p595, %s33, 1
        %s597 = smul.addr %s596, 4
        %s598 = smul.addr %s597, 8
        %s599 = scalar_lea.vmem %s0, %s598
        %v600 = vld [vmem:[%s599] sm:$0xff]
        %v601 = vld [vmem:[%s599 + $0x8] sm:$0xff]
        %v602 = vld [vmem:[%s599 + $0x10] sm:$0xff]
        %v603 = vld [vmem:[%s599 + $0x18] sm:$0xff]
        %v604 = vld [vmem:[%s1] sm:$0xff]
        %v605 = vld [vmem:[%s1 + $0x8] sm:$0xff]
        %v606 = vld [vmem:[%s1 + $0x10] sm:$0xff]
        %v607 = vld [vmem:[%s1 + $0x18] sm:$0xff]
        %v608 = vld [vmem:[%s1 + $0x20] sm:$0xff]
        %v609 = vld [vmem:[%s1 + $0x28] sm:$0xff]
        %v610 = vld [vmem:[%s1 + $0x30] sm:$0xff]
        %v611 = vld [vmem:[%s1 + $0x38] sm:$0xff]
        %v612 = vld [vmem:[%s1 + $0x40] sm:$0xff]
        %v613 = vld [vmem:[%s1 + $0x48] sm:$0xff]
        %v614 = vld [vmem:[%s1 + $0x50] sm:$0xff]
        %v615 = vld [vmem:[%s1 + $0x58] sm:$0xff]
        %v616 = vld [vmem:[%s1 + $0x60] sm:$0xff]
        %v617 = vld [vmem:[%s1 + $0x68] sm:$0xff]
        %v618 = vld [vmem:[%s1 + $0x70] sm:$0xff]
        %v619 = vld [vmem:[%s1 + $0x78] sm:$0xff]
        %v620 = vld [vmem:[%s1 + $0x80] sm:$0xff]
        %v621 = vld [vmem:[%s1 + $0x88] sm:$0xff]
        %v622 = vld [vmem:[%s1 + $0x90] sm:$0xff]
        %v623 = vld [vmem:[%s1 + $0x98] sm:$0xff]
        %v624 = vld [vmem:[%s1 + $0xa0] sm:$0xff]
        %v625 = vld [vmem:[%s1 + $0xa8] sm:$0xff]
        %v626 = vld [vmem:[%s1 + $0xb0] sm:$0xff]
        %v627 = vld [vmem:[%s1 + $0xb8] sm:$0xff]
        %v628 = vld [vmem:[%s2] sm:$0x1]
        %v630 = vlaneseq
        %v631 = vshrl.u32 %v630, 7
        %v632 = vsub.s32 0, %v631
        %v633 = vrot.slane %v628, %v632
        %vm635 = vcmask 523264
        %v637 = vsel %vm635, %v601, 0
        %v640 = vsel %vm635, %v603, 0
        %642 = vmatprep.subr.mxu0 0.0
        %643 = vmatpush1.msra.mxu0 %v604
        %644 = vmatprep.subr.mxu0 0.0
        %645 = vmatpush1.msra.mxu0 %v605
        %646 = vmatprep.subr.mxu0 0.0
        %647 = vmatpush1.msra.mxu0 %v606
        %648 = vmatprep.subr.mxu0 0.0
        %649 = vmatpush1.msra.mxu0 %v607
        %650 = vmatprep.subr.mxu0 0.0
        %651 = vmatpush1.msra.mxu0 %v608
        %652 = vmatprep.subr.mxu0 0.0
        %653 = vmatpush1.msra.mxu0 %v609
        %654 = vmatprep.subr.mxu0 0.0
        %655 = vmatpush1.msra.mxu0 %v610
        %656 = vmatprep.subr.mxu0 0.0
        %657 = vmatpush1.msra.mxu0 %v611
        %658 = vmatprep.subr.mxu0 0.0
        %659 = vmatpush1.msra.mxu0 %v612
        %660 = vmatprep.subr.mxu0 0.0
        %661 = vmatpush1.msra.mxu0 %v613
        %662 = vmatprep.subr.mxu0 0.0
        %663 = vmatpush1.msra.mxu0 %v614
        %664 = vmatprep.subr.mxu0 0.0
        %665 = vmatpush1.msra.mxu0 %v615
        %666 = vmatprep.subr.mxu0 0.0
        %667 = vmatpush1.msra.mxu0 %v616
        %668 = vmatprep.subr.mxu0 0.0
        %669 = vmatpush1.msra.mxu0 %v617
        %670 = vmatprep.subr.mxu0 0.0
        %671 = vmatpush1.msra.mxu0 %v618
        %672 = vmatprep.subr.mxu0 0.0
        %673 = vmatpush1.msra.mxu0 %v619
        %674 = vmatprep.subr.mxu0 0.0
        %675 = vmatpush1.msra.mxu0 %v620
        %676 = vmatprep.subr.mxu0 0.0
        %677 = vmatpush1.msra.mxu0 %v621
        %678 = vmatprep.subr.mxu0 0.0
        %679 = vmatpush1.msra.mxu0 %v622
        %680 = vmatprep.subr.mxu0 0.0
        %681 = vmatpush1.msra.mxu0 %v623
        %682 = vmatprep.subr.mxu0 0.0
        %683 = vmatpush1.msra.mxu0 %v624
        %684 = vmatprep.subr.mxu0 0.0
        %685 = vmatpush1.msra.mxu0 %v625
        %686 = vmatprep.subr.mxu0 0.0
        %687 = vmatpush1.msra.mxu0 %v626
        %688 = vmatprep.subr.mxu0 0.0
        %689 = vmatpush1.msra.mxu0 %v627
        %690 = vmatprep.subr.mxu0 0.0
        %691 = vmatpush1.msra.mxu0 0.0
        %692 = vmatprep.subr.mxu0 0.0
        %693 = vmatpush1.msra.mxu0 0.0
        %694 = vmatprep.subr.mxu0 0.0
        %695 = vmatpush1.msra.mxu0 0.0
        %696 = vmatprep.subr.mxu0 0.0
        %697 = vmatpush1.msra.mxu0 0.0
        %698 = vmatprep.subr.mxu0 0.0
        %699 = vmatpush1.msra.mxu0 0.0
        %700 = vmatprep.subr.mxu0 0.0
        %701 = vmatpush1.msra.mxu0 0.0
        %702 = vmatprep.subr.mxu0 0.0
        %703 = vmatpush1.msra.mxu0 0.0
        %704 = vmatprep.subr.mxu0 0.0
        %705 = vmatpush1.msra.mxu0 0.0
        %706 = vmatprep.mubr.f32.mxu0 %v637
        %707 = vmatmul.mubr.f32.gmra.mrb[0].mxu0 %v600
        %v708 = vpop.f32.mrb[0].mxu0
        %v709 = vadd.f32 %v633, %v708
        %v710 = vpop.f32.mrb[0].mxu0
        %711 = vmatprep.mubr.f32.mxu0 %v640
        %712 = vmatmul.mubr.f32.gmra.mrb[0].mxu0 %v602
        %v713 = vpop.f32.mrb[0].mxu0
        %v714 = vadd.f32 %v633, %v713
        %v715 = vpop.f32.mrb[0].mxu0
        %716 = vdwg.mxu0
        %v717 = vld [vmem:[%s3] sm:$0x1]
        %v718 = vld [vmem:[%s4] sm:$0x1]
        %vm719 = vcmask 261120
        %v720 = vsel %vm719, %v709, 0.0
        %721 = vadd.xlane.f32.xlu0 %v720
        %v722 = vpop.xlane.xlu0 %721
        %v723 = vsel %vm719, %v714, 0.0
        %724 = vadd.xlane.f32.xlu0 %v723
        %v725 = vpop.xlane.xlu0 %724
        %v726 = vrcp.pop 32.0
        %v727 = vmul.f32 %v722, %v726
        %v728 = vmul.f32 %v725, %v726
        %v729 = vsub.f32 %v709, %v727
        %v730 = vsub.f32 %v714, %v728
        %v731 = vmul.f32 %v729, %v729
        %v732 = vmul.f32 %v730, %v730
        %v733 = vsel %vm719, %v731, 0.0
        %734 = vadd.xlane.f32.xlu0 %v733
        %v735 = vpop.xlane.xlu0 %734
        %v736 = vsel %vm719, %v732, 0.0
        %737 = vadd.xlane.f32.xlu0 %v736
        %v738 = vpop.xlane.xlu0 %737
        %v739 = vmul.f32 %v735, %v726
        %v740 = vmul.f32 %v738, %v726
        %v741 = vadd.f32 %v739, 1e-06
        %v742 = vadd.f32 %v740, 1e-06
        %v743 = vrsqrt.pop %v741
        %v744 = vrsqrt.pop %v742
        %v745 = vmul.f32 %v729, %v743
        %v746 = vmul.f32 %v730, %v744
        %v748 = vlaneseq
        %v749 = vshrl.u32 %v748, 7
        %v750 = vsub.s32 0, %v749
        %v751 = vrot.slane %v717, %v750
        %v753 = vmul.f32 %v745, %v751
        %v754 = vmul.f32 %v746, %v751
        %v756 = vlaneseq
        %v757 = vshrl.u32 %v756, 7
        %v758 = vsub.s32 0, %v757
        %v759 = vrot.slane %v718, %v758
        %v761 = vadd.f32 %v753, %v759
        %v762 = vadd.f32 %v754, %v759
        %v763 = vld [vmem:[%s5] sm:$0xff]
        %v764 = vld [vmem:[%s5 + $0x8] sm:$0xff]
        %v765 = vld [vmem:[%s6] sm:$0x1]
        %v767 = vlaneseq
        %v768 = vshrl.u32 %v767, 7
        %v769 = vsub.s32 0, %v768
        %v770 = vrot.slane %v765, %v769
        %772 = vxpose.xlu0.b32.start [1/16] %v761, 128
        %773 = vxpose.xlu0.b32.cont [2/16] %v762, 128
        %774 = vxpose.xlu0.b32.cont [3/16] 0.0, 128
        %775 = vxpose.xlu0.b32.cont [4/16] 0.0, 128
        %776 = vxpose.xlu0.b32.cont [5/16] 0.0, 128
        %777 = vxpose.xlu0.b32.cont [6/16] 0.0, 128
        %778 = vxpose.xlu0.b32.cont [7/16] 0.0, 128
        %779 = vxpose.xlu0.b32.cont [8/16] 0.0, 128
        %780 = vxpose.xlu0.b32.cont [9/16] 0.0, 128
        %781 = vxpose.xlu0.b32.cont [10/16] 0.0, 128
        %782 = vxpose.xlu0.b32.cont [11/16] 0.0, 128
        %783 = vxpose.xlu0.b32.cont [12/16] 0.0, 128
        %784 = vxpose.xlu0.b32.cont [13/16] 0.0, 128
        %785 = vxpose.xlu0.b32.cont [14/16] 0.0, 128
        %786 = vxpose.xlu0.b32.cont [15/16] 0.0, 128
        %787 = vxpose.xlu0.b32.end [16/16] 0.0, 128
        %v788 = vpop.trf.xlu0
        %v789 = vpop.trf.xlu0
        %v790 = vpop.trf.xlu0
        %v791 = vpop.trf.xlu0
        %v792 = vpop.trf.xlu0
        %v793 = vpop.trf.xlu0
        %v794 = vpop.trf.xlu0
        %v795 = vpop.trf.xlu0
        %v796 = vpop.trf.xlu0
        %v797 = vpop.trf.xlu0
        %v798 = vpop.trf.xlu0
        %v799 = vpop.trf.xlu0
        %v800 = vpop.trf.xlu0
        %v801 = vpop.trf.xlu0
        %v802 = vpop.trf.xlu0
        %v803 = vpop.trf.xlu0
        %vm804 = vcmask 130048
        %v806 = vsel %vm804, %v788, 0
        %v809 = vsel %vm804, %v789, 0
        %v812 = vsel %vm804, %v790, 0
        %v815 = vsel %vm804, %v791, 0
        %817 = vmatprep.subr.mxu0 0.0
        %818 = vmatpush1.msra.mxu0 %v763
        %819 = vmatprep.subr.mxu0 0.0
        %820 = vmatpush1.msra.mxu0 %v764
        %821 = vmatprep.subr.mxu0 0.0
        %822 = vmatpush1.msra.mxu0 0.0
        %823 = vmatprep.subr.mxu0 0.0
        %824 = vmatpush1.msra.mxu0 0.0
        %825 = vmatprep.subr.mxu0 0.0
        %826 = vmatpush1.msra.mxu0 0.0
        %827 = vmatprep.subr.mxu0 0.0
        %828 = vmatpush1.msra.mxu0 0.0
        %829 = vmatprep.subr.mxu0 0.0
        %830 = vmatpush1.msra.mxu0 0.0
        %831 = vmatprep.subr.mxu0 0.0
        %832 = vmatpush1.msra.mxu0 0.0
        %833 = vmatprep.subr.mxu0 0.0
        %834 = vmatpush1.msra.mxu0 0.0
        %835 = vmatprep.subr.mxu0 0.0
        %836 = vmatpush1.msra.mxu0 0.0
        %837 = vmatprep.subr.mxu0 0.0
        %838 = vmatpush1.msra.mxu0 0.0
        %839 = vmatprep.subr.mxu0 0.0
        %840 = vmatpush1.msra.mxu0 0.0
        %841 = vmatprep.subr.mxu0 0.0
        %842 = vmatpush1.msra.mxu0 0.0
        %843 = vmatprep.subr.mxu0 0.0
        %844 = vmatpush1.msra.mxu0 0.0
        %845 = vmatprep.subr.mxu0 0.0
        %846 = vmatpush1.msra.mxu0 0.0
        %847 = vmatprep.subr.mxu0 0.0
        %848 = vmatpush1.msra.mxu0 0.0
        %849 = vmatprep.subr.mxu0 0.0
        %850 = vmatpush1.msra.mxu0 0.0
        %851 = vmatprep.subr.mxu0 0.0
        %852 = vmatpush1.msra.mxu0 0.0
        %853 = vmatprep.subr.mxu0 0.0
        %854 = vmatpush1.msra.mxu0 0.0
        %855 = vmatprep.subr.mxu0 0.0
        %856 = vmatpush1.msra.mxu0 0.0
        %857 = vmatprep.subr.mxu0 0.0
        %858 = vmatpush1.msra.mxu0 0.0
        %859 = vmatprep.subr.mxu0 0.0
        %860 = vmatpush1.msra.mxu0 0.0
        %861 = vmatprep.subr.mxu0 0.0
        %862 = vmatpush1.msra.mxu0 0.0
        %863 = vmatprep.subr.mxu0 0.0
        %864 = vmatpush1.msra.mxu0 0.0
        %865 = vmatprep.subr.mxu0 0.0
        %866 = vmatpush1.msra.mxu0 0.0
        %867 = vmatprep.subr.mxu0 0.0
        %868 = vmatpush1.msra.mxu0 0.0
        %869 = vmatprep.subr.mxu0 0.0
        %870 = vmatpush1.msra.mxu0 0.0
        %871 = vmatprep.subr.mxu0 0.0
        %872 = vmatpush1.msra.mxu0 0.0
        %873 = vmatprep.subr.mxu0 0.0
        %874 = vmatpush1.msra.mxu0 0.0
        %875 = vmatprep.subr.mxu0 0.0
        %876 = vmatpush1.msra.mxu0 0.0
        %877 = vmatprep.subr.mxu0 0.0
        %878 = vmatpush1.msra.mxu0 0.0
        %879 = vmatprep.subr.mxu0 0.0
        %880 = vmatpush1.msra.mxu0 0.0
        %881 = vmatprep.mubr.f32.mxu0 0.0
        %882 = vmatmul.mubr.f32.gmra.mrb[0].mxu0 %v806
        %v883 = vpop.f32.mrb[0].mxu0
        %v884 = vadd.f32 %v770, %v883
        %v885 = vpop.f32.mrb[0].mxu0
        %886 = vmatprep.mubr.f32.mxu0 0.0
        %887 = vmatmul.mubr.f32.gmra.mrb[0].mxu0 %v809
        %v888 = vpop.f32.mrb[0].mxu0
        %v889 = vadd.f32 %v770, %v888
        %v890 = vpop.f32.mrb[0].mxu0
        %891 = vmatprep.mubr.f32.mxu0 0.0
        %892 = vmatmul.mubr.f32.gmra.mrb[0].mxu0 %v812
        %v893 = vpop.f32.mrb[0].mxu0
        %v894 = vadd.f32 %v770, %v893
        %v895 = vpop.f32.mrb[0].mxu0
        %896 = vmatprep.mubr.f32.mxu0 0.0
        %897 = vmatmul.mubr.f32.gmra.mrb[0].mxu0 %v815
        %v898 = vpop.f32.mrb[0].mxu0
        %v899 = vadd.f32 %v770, %v898
        %v900 = vpop.f32.mrb[0].mxu0
        %901 = vdwg.mxu0
        %v902 = vmul.f32 %v884, 0.5
        %v903 = vmul.f32 %v889, 0.5
        %v904 = vmul.f32 %v894, 0.5
        %v905 = vmul.f32 %v899, 0.5
        %v906 = vmul.f32 %v884, 0.70710677
        %v907 = vmul.f32 %v889, 0.70710677
        %v908 = vmul.f32 %v894, 0.70710677
        %v909 = vmul.f32 %v899, 0.70710677
        %v910 = verf.f32.pop %v906
        %v911 = verf.f32.pop %v907
        %v912 = verf.f32.pop %v908
        %v913 = verf.f32.pop %v909
        %v914 = vadd.f32 %v910, 1.0
        %v915 = vadd.f32 %v911, 1.0
        %v916 = vadd.f32 %v912, 1.0
        %v917 = vadd.f32 %v913, 1.0
        %v918 = vmul.f32 %v902, %v914
        %v919 = vmul.f32 %v903, %v915
        %v920 = vmul.f32 %v904, %v916
        %v921 = vmul.f32 %v905, %v917
        %v922 = vld [vmem:[%s7] sm:$0xff]
        %v923 = vld [vmem:[%s7 + $0x8] sm:$0xff]
        %924 = vxpose.xlu0.b32.start [1/16] %v922, 128
        %925 = vxpose.xlu0.b32.cont [2/16] %v923, 128
        %926 = vxpose.xlu0.b32.cont [3/16] 0.0, 128
        %927 = vxpose.xlu0.b32.cont [4/16] 0.0, 128
        %928 = vxpose.xlu0.b32.cont [5/16] 0.0, 128
        %929 = vxpose.xlu0.b32.cont [6/16] 0.0, 128
        %930 = vxpose.xlu0.b32.cont [7/16] 0.0, 128
        %931 = vxpose.xlu0.b32.cont [8/16] 0.0, 128
        %932 = vxpose.xlu0.b32.cont [9/16] 0.0, 128
        %933 = vxpose.xlu0.b32.cont [10/16] 0.0, 128
        %934 = vxpose.xlu0.b32.cont [11/16] 0.0, 128
        %935 = vxpose.xlu0.b32.cont [12/16] 0.0, 128
        %936 = vxpose.xlu0.b32.cont [13/16] 0.0, 128
        %937 = vxpose.xlu0.b32.cont [14/16] 0.0, 128
        %938 = vxpose.xlu0.b32.cont [15/16] 0.0, 128
        %939 = vxpose.xlu0.b32.end [16/16] 0.0, 128
        %v940 = vpop.trf.xlu0
        %v941 = vpop.trf.xlu0
        %v942 = vpop.trf.xlu0
        %v943 = vpop.trf.xlu0
        %v944 = vpop.trf.xlu0
        %v945 = vpop.trf.xlu0
        %v946 = vpop.trf.xlu0
        %v947 = vpop.trf.xlu0
        %v948 = vpop.trf.xlu0
        %v949 = vpop.trf.xlu0
        %v950 = vpop.trf.xlu0
        %v951 = vpop.trf.xlu0
        %v952 = vpop.trf.xlu0
        %v953 = vpop.trf.xlu0
        %v954 = vpop.trf.xlu0
        %v955 = vpop.trf.xlu0
        %v957 = vsel %vm804, %v940, 0
        %v960 = vsel %vm804, %v941, 0
        %v963 = vsel %vm804, %v918, 0
        %v966 = vsel %vm804, %v919, 0
        %v969 = vsel %vm804, %v920, 0
        %v972 = vsel %vm804, %v921, 0
        %974 = vmatprep.subr.mxu0 0.0
        %975 = vmatpush1.xpose.msra.mxu0 %v963
        %976 = vmatprep.subr.mxu0 0.0
        %977 = vmatpush1.xpose.msra.mxu0 %v966
        %978 = vmatprep.subr.mxu0 0.0
        %979 = vmatpush1.xpose.msra.mxu0 %v969
        %980 = vmatprep.subr.mxu0 0.0
        %981 = vmatpush1.xpose.msra.mxu0 %v972
        %982 = vmatprep.subr.mxu0 0.0
        %983 = vmatpush1.xpose.msra.mxu0 0.0
        %984 = vmatprep.subr.mxu0 0.0
        %985 = vmatpush1.xpose.msra.mxu0 0.0
        %986 = vmatprep.subr.mxu0 0.0
        %987 = vmatpush1.xpose.msra.mxu0 0.0
        %988 = vmatprep.subr.mxu0 0.0
        %989 = vmatpush1.xpose.msra.mxu0 0.0
        %990 = vmatprep.subr.mxu0 0.0
        %991 = vmatpush1.xpose.msra.mxu0 0.0
        %992 = vmatprep.subr.mxu0 0.0
        %993 = vmatpush1.xpose.msra.mxu0 0.0
        %994 = vmatprep.subr.mxu0 0.0
        %995 = vmatpush1.xpose.msra.mxu0 0.0
        %996 = vmatprep.subr.mxu0 0.0
        %997 = vmatpush1.xpose.msra.mxu0 0.0
        %998 = vmatprep.subr.mxu0 0.0
        %999 = vmatpush1.xpose.msra.mxu0 0.0
        %1000 = vmatprep.subr.mxu0 0.0
        %1001 = vmatpush1.xpose.msra.mxu0 0.0
        %1002 = vmatprep.subr.mxu0 0.0
        %1003 = vmatpush1.xpose.msra.mxu0 0.0
        %1004 = vmatprep.subr.mxu0 0.0
        %1005 = vmatpush1.xpose.msra.mxu0 0.0
        %1006 = vmatprep.subr.mxu0 0.0
        %1007 = vmatpush1.xpose.msra.mxu0 0.0
        %1008 = vmatprep.subr.mxu0 0.0
        %1009 = vmatpush1.xpose.msra.mxu0 0.0
        %1010 = vmatprep.subr.mxu0 0.0
        %1011 = vmatpush1.xpose.msra.mxu0 0.0
        %1012 = vmatprep.subr.mxu0 0.0
        %1013 = vmatpush1.xpose.msra.mxu0 0.0
        %1014 = vmatprep.subr.mxu0 0.0
        %1015 = vmatpush1.xpose.msra.mxu0 0.0
        %1016 = vmatprep.subr.mxu0 0.0
        %1017 = vmatpush1.xpose.msra.mxu0 0.0
        %1018 = vmatprep.subr.mxu0 0.0
        %1019 = vmatpush1.xpose.msra.mxu0 0.0
        %1020 = vmatprep.subr.mxu0 0.0
        %1021 = vmatpush1.xpose.msra.mxu0 0.0
        %1022 = vmatprep.subr.mxu0 0.0
        %1023 = vmatpush1.xpose.msra.mxu0 0.0
        %1024 = vmatprep.subr.mxu0 0.0
        %1025 = vmatpush1.xpose.msra.mxu0 0.0
        %1026 = vmatprep.subr.mxu0 0.0
        %1027 = vmatpush1.xpose.msra.mxu0 0.0
        %1028 = vmatprep.subr.mxu0 0.0
        %1029 = vmatpush1.xpose.msra.mxu0 0.0
        %1030 = vmatprep.subr.mxu0 0.0
        %1031 = vmatpush1.xpose.msra.mxu0 0.0
        %1032 = vmatprep.subr.mxu0 0.0
        %1033 = vmatpush1.xpose.msra.mxu0 0.0
        %1034 = vmatprep.subr.mxu0 0.0
        %1035 = vmatpush1.xpose.msra.mxu0 0.0
        %1036 = vmatprep.subr.mxu0 0.0
        %1037 = vmatpush1.xpose.msra.mxu0 0.0
        %1038 = vmatprep.mubr.f32.mxu0 0.0
        %1039 = vmatmul.mubr.f32.gmra.mrb[0].mxu0 %v957
        %v1040 = vpop.f32.mrb[0].mxu0
        %v1041 = vadd.f32 0.0, %v1040
        %v1042 = vpop.f32.mrb[0].mxu0
        %1043 = vmatprep.mubr.f32.mxu0 0.0
        %1044 = vmatmul.mubr.f32.gmra.mrb[0].mxu0 %v960
        %v1045 = vpop.f32.mrb[0].mxu0
        %v1046 = vadd.f32 0.0, %v1045
        %v1047 = vpop.f32.mrb[0].mxu0
        %1048 = vdwg.mxu0
        %v1049 = vadd.f32 %v709, %v1041
        %v1050 = vadd.f32 %v714, %v1046
        %v1051 = vld [vmem:[%s8] sm:$0xff]
        %v1052 = vld [vmem:[%s8 + $0x8] sm:$0xff]
        %1054 = vset.pattern.permute.xlu0 0
        %1055 = vperm.xlu0 %1054, %v1051
        %v1056 = vpop.permute.xlu0 %1055
        %1059 = vset.pattern.permute.xlu0 0
        %1060 = vperm.xlu0 %1059, %v1052
        %v1061 = vpop.permute.xlu0 %1060
        %v1063 = vadd.f32 %v1049, %v1056
        %v1064 = vadd.f32 %v1050, %v1061
        %v1065 = vld [vmem:[%s9] sm:$0x1]
        %v1066 = vld [vmem:[%s10] sm:$0x1]
        %v1067 = vsel %vm719, %v1063, 0.0
        %1068 = vadd.xlane.f32.xlu0 %v1067
        %v1069 = vpop.xlane.xlu0 %1068
        %v1070 = vsel %vm719, %v1064, 0.0
        %1071 = vadd.xlane.f32.xlu0 %v1070
        %v1072 = vpop.xlane.xlu0 %1071
        %v1073 = vmul.f32 %v1069, %v726
        %v1074 = vmul.f32 %v1072, %v726
        %v1075 = vsub.f32 %v1063, %v1073
        %v1076 = vsub.f32 %v1064, %v1074
        %v1077 = vmul.f32 %v1075, %v1075
        %v1078 = vmul.f32 %v1076, %v1076
        %v1079 = vsel %vm719, %v1077, 0.0
        %1080 = vadd.xlane.f32.xlu0 %v1079
        %v1081 = vpop.xlane.xlu0 %1080
        %v1082 = vsel %vm719, %v1078, 0.0
        %1083 = vadd.xlane.f32.xlu0 %v1082
        %v1084 = vpop.xlane.xlu0 %1083
        %v1085 = vmul.f32 %v1081, %v726
        %v1086 = vmul.f32 %v1084, %v726
        %v1087 = vadd.f32 %v1085, 1e-06
        %v1088 = vadd.f32 %v1086, 1e-06
        %v1089 = vrsqrt.pop %v1087
        %v1090 = vrsqrt.pop %v1088
        %v1091 = vmul.f32 %v1075, %v1089
        %v1092 = vmul.f32 %v1076, %v1090
        %v1094 = vlaneseq
        %v1095 = vshrl.u32 %v1094, 7
        %v1096 = vsub.s32 0, %v1095
        %v1097 = vrot.slane %v1065, %v1096
        %v1099 = vmul.f32 %v1091, %v1097
        %v1100 = vmul.f32 %v1092, %v1097
        %v1102 = vlaneseq
        %v1103 = vshrl.u32 %v1102, 7
        %v1104 = vsub.s32 0, %v1103
        %v1105 = vrot.slane %v1066, %v1104
        %v1107 = vadd.f32 %v1099, %v1105
        %v1108 = vadd.f32 %v1100, %v1105
        %v1109 = vld [vmem:[%s11] sm:$0xff]
        %v1110 = vld [vmem:[%s11 + $0x8] sm:$0xff]
        %v1111 = vld [vmem:[%s11 + $0x10] sm:$0xff]
        %v1112 = vld [vmem:[%s11 + $0x18] sm:$0xff]
        %v1113 = vld [vmem:[%s12] sm:$0x1]
        %v1115 = vlaneseq
        %v1116 = vshrl.u32 %v1115, 7
        %v1117 = vsub.s32 0, %v1116
        %v1118 = vrot.slane %v1113, %v1117
        %v1121 = vsel %vm719, %v1107, 0
        %v1124 = vsel %vm719, %v1108, 0
        %1126 = vmatprep.subr.mxu0 0.0
        %1127 = vmatpush1.msra.mxu0 %v1109
        %1128 = vmatprep.subr.mxu0 0.0
        %1129 = vmatpush1.msra.mxu0 %v1110
        %1130 = vmatprep.subr.mxu0 0.0
        %1131 = vmatpush1.msra.mxu0 %v1111
        %1132 = vmatprep.subr.mxu0 0.0
        %1133 = vmatpush1.msra.mxu0 %v1112
        %1134 = vmatprep.subr.mxu0 0.0
        %1135 = vmatpush1.msra.mxu0 0.0
        %1136 = vmatprep.subr.mxu0 0.0
        %1137 = vmatpush1.msra.mxu0 0.0
        %1138 = vmatprep.subr.mxu0 0.0
        %1139 = vmatpush1.msra.mxu0 0.0
        %1140 = vmatprep.subr.mxu0 0.0
        %1141 = vmatpush1.msra.mxu0 0.0
        %1142 = vmatprep.subr.mxu0 0.0
        %1143 = vmatpush1.msra.mxu0 0.0
        %1144 = vmatprep.subr.mxu0 0.0
        %1145 = vmatpush1.msra.mxu0 0.0
        %1146 = vmatprep.subr.mxu0 0.0
        %1147 = vmatpush1.msra.mxu0 0.0
        %1148 = vmatprep.subr.mxu0 0.0
        %1149 = vmatpush1.msra.mxu0 0.0
        %1150 = vmatprep.subr.mxu0 0.0
        %1151 = vmatpush1.msra.mxu0 0.0
        %1152 = vmatprep.subr.mxu0 0.0
        %1153 = vmatpush1.msra.mxu0 0.0
        %1154 = vmatprep.subr.mxu0 0.0
        %1155 = vmatpush1.msra.mxu0 0.0
        %1156 = vmatprep.subr.mxu0 0.0
        %1157 = vmatpush1.msra.mxu0 0.0
        %1158 = vmatprep.subr.mxu0 0.0
        %1159 = vmatpush1.msra.mxu0 0.0
        %1160 = vmatprep.subr.mxu0 0.0
        %1161 = vmatpush1.msra.mxu0 0.0
        %1162 = vmatprep.subr.mxu0 0.0
        %1163 = vmatpush1.msra.mxu0 0.0
        %1164 = vmatprep.subr.mxu0 0.0
        %1165 = vmatpush1.msra.mxu0 0.0
        %1166 = vmatprep.subr.mxu0 0.0
        %1167 = vmatpush1.msra.mxu0 0.0
        %1168 = vmatprep.subr.mxu0 0.0
        %1169 = vmatpush1.msra.mxu0 0.0
        %1170 = vmatprep.subr.mxu0 0.0
        %1171 = vmatpush1.msra.mxu0 0.0
        %1172 = vmatprep.subr.mxu0 0.0
        %1173 = vmatpush1.msra.mxu0 0.0
        %1174 = vmatprep.subr.mxu0 0.0
        %1175 = vmatpush1.msra.mxu0 0.0
        %1176 = vmatprep.subr.mxu0 0.0
        %1177 = vmatpush1.msra.mxu0 0.0
        %1178 = vmatprep.subr.mxu0 0.0
        %1179 = vmatpush1.msra.mxu0 0.0
        %1180 = vmatprep.subr.mxu0 0.0
        %1181 = vmatpush1.msra.mxu0 0.0
        %1182 = vmatprep.subr.mxu0 0.0
        %1183 = vmatpush1.msra.mxu0 0.0
        %1184 = vmatprep.subr.mxu0 0.0
        %1185 = vmatpush1.msra.mxu0 0.0
        %1186 = vmatprep.subr.mxu0 0.0
        %1187 = vmatpush1.msra.mxu0 0.0
        %1188 = vmatprep.subr.mxu0 0.0
        %1189 = vmatpush1.msra.mxu0 0.0
        %1190 = vmatprep.mubr.f32.mxu0 0.0
        %1191 = vmatmul.mubr.f32.gmra.mrb[0].mxu0 %v1121
        %v1192 = vpop.f32.mrb[0].mxu0
        %v1193 = vadd.f32 %v1118, %v1192
        %v1194 = vpop.f32.mrb[0].mxu0
        %1195 = vmatprep.mubr.f32.mxu0 0.0
        %1196 = vmatmul.mubr.f32.gmra.mrb[0].mxu0 %v1124
        %v1197 = vpop.f32.mrb[0].mxu0
        %v1198 = vadd.f32 %v1118, %v1197
        %v1199 = vpop.f32.mrb[0].mxu0
        %1200 = vdwg.mxu0
        %v1201 = vmul.f32 %v1193, 0.5
        %v1202 = vmul.f32 %v1198, 0.5
        %v1203 = vmul.f32 %v1193, 0.70710677
        %v1204 = vmul.f32 %v1198, 0.70710677
        %v1205 = verf.f32.pop %v1203
        %v1206 = verf.f32.pop %v1204
        %v1207 = vadd.f32 %v1205, 1.0
        %v1208 = vadd.f32 %v1206, 1.0
        %v1209 = vmul.f32 %v1201, %v1207
        %v1210 = vmul.f32 %v1202, %v1208
        %v1211 = vld [vmem:[%s13] sm:$0xff]
        %v1212 = vld [vmem:[%s13 + $0x8] sm:$0xff]
        %v1213 = vld [vmem:[%s13 + $0x10] sm:$0xff]
        %v1214 = vld [vmem:[%s13 + $0x18] sm:$0xff]
        %v1215 = vld [vmem:[%s13 + $0x20] sm:$0xff]
        %v1216 = vld [vmem:[%s13 + $0x28] sm:$0xff]
        %v1217 = vld [vmem:[%s13 + $0x30] sm:$0xff]
        %v1218 = vld [vmem:[%s13 + $0x38] sm:$0xff]
        %v1219 = vld [vmem:[%s14] sm:$0x1]
        %v1221 = vlaneseq
        %v1222 = vshrl.u32 %v1221, 7
        %v1223 = vsub.s32 0, %v1222
        %v1224 = vrot.slane %v1219, %v1223
        %v1227 = vsel %vm635, %v1209, 0
        %v1230 = vsel %vm635, %v1210, 0
        %1232 = vmatprep.subr.mxu0 0.0
        %1233 = vmatpush1.msra.mxu0 %v1211
        %1234 = vmatprep.subr.mxu0 0.0
        %1235 = vmatpush1.msra.mxu0 %v1212
        %1236 = vmatprep.subr.mxu0 0.0
        %1237 = vmatpush1.msra.mxu0 %v1213
        %1238 = vmatprep.subr.mxu0 0.0
        %1239 = vmatpush1.msra.mxu0 %v1214
        %1240 = vmatprep.subr.mxu0 0.0
        %1241 = vmatpush1.msra.mxu0 %v1215
        %1242 = vmatprep.subr.mxu0 0.0
        %1243 = vmatpush1.msra.mxu0 %v1216
        %1244 = vmatprep.subr.mxu0 0.0
        %1245 = vmatpush1.msra.mxu0 %v1217
        %1246 = vmatprep.subr.mxu0 0.0
        %1247 = vmatpush1.msra.mxu0 %v1218
        %1248 = vmatprep.subr.mxu0 0.0
        %1249 = vmatpush1.msra.mxu0 0.0
        %1250 = vmatprep.subr.mxu0 0.0
        %1251 = vmatpush1.msra.mxu0 0.0
        %1252 = vmatprep.subr.mxu0 0.0
        %1253 = vmatpush1.msra.mxu0 0.0
        %1254 = vmatprep.subr.mxu0 0.0
        %1255 = vmatpush1.msra.mxu0 0.0
        %1256 = vmatprep.subr.mxu0 0.0
        %1257 = vmatpush1.msra.mxu0 0.0
        %1258 = vmatprep.subr.mxu0 0.0
        %1259 = vmatpush1.msra.mxu0 0.0
        %1260 = vmatprep.subr.mxu0 0.0
        %1261 = vmatpush1.msra.mxu0 0.0
        %1262 = vmatprep.subr.mxu0 0.0
        %1263 = vmatpush1.msra.mxu0 0.0
        %1264 = vmatprep.subr.mxu0 0.0
        %1265 = vmatpush1.msra.mxu0 0.0
        %1266 = vmatprep.subr.mxu0 0.0
        %1267 = vmatpush1.msra.mxu0 0.0
        %1268 = vmatprep.subr.mxu0 0.0
        %1269 = vmatpush1.msra.mxu0 0.0
        %1270 = vmatprep.subr.mxu0 0.0
        %1271 = vmatpush1.msra.mxu0 0.0
        %1272 = vmatprep.subr.mxu0 0.0
        %1273 = vmatpush1.msra.mxu0 0.0
        %1274 = vmatprep.subr.mxu0 0.0
        %1275 = vmatpush1.msra.mxu0 0.0
        %1276 = vmatprep.subr.mxu0 0.0
        %1277 = vmatpush1.msra.mxu0 0.0
        %1278 = vmatprep.subr.mxu0 0.0
        %1279 = vmatpush1.msra.mxu0 0.0
        %1280 = vmatprep.subr.mxu0 0.0
        %1281 = vmatpush1.msra.mxu0 0.0
        %1282 = vmatprep.subr.mxu0 0.0
        %1283 = vmatpush1.msra.mxu0 0.0
        %1284 = vmatprep.subr.mxu0 0.0
        %1285 = vmatpush1.msra.mxu0 0.0
        %1286 = vmatprep.subr.mxu0 0.0
        %1287 = vmatpush1.msra.mxu0 0.0
        %1288 = vmatprep.subr.mxu0 0.0
        %1289 = vmatpush1.msra.mxu0 0.0
        %1290 = vmatprep.subr.mxu0 0.0
        %1291 = vmatpush1.msra.mxu0 0.0
        %1292 = vmatprep.subr.mxu0 0.0
        %1293 = vmatpush1.msra.mxu0 0.0
        %1294 = vmatprep.subr.mxu0 0.0
        %1295 = vmatpush1.msra.mxu0 0.0
        %1296 = vmatprep.mubr.f32.mxu0 0.0
        %1297 = vmatmul.mubr.f32.gmra.mrb[0].mxu0 %v1227
        %v1298 = vpop.f32.mrb[0].mxu0
        %v1299 = vadd.f32 %v1224, %v1298
        %v1300 = vpop.f32.mrb[0].mxu0
        %1301 = vmatprep.mubr.f32.mxu0 0.0
        %1302 = vmatmul.mubr.f32.gmra.mrb[0].mxu0 %v1230
        %v1303 = vpop.f32.mrb[0].mxu0
        %v1304 = vadd.f32 %v1224, %v1303
        %v1305 = vpop.f32.mrb[0].mxu0
        %1306 = vdwg.mxu0
        %v1307 = vadd.f32 %v1063, %v1299
        %v1308 = vadd.f32 %v1064, %v1304
        %s1309 = scalar_lea.vmem %s3, 1
        %v1310 = vld [vmem:[%s1309] sm:$0x1]
        %s1311 = scalar_lea.vmem %s4, 1
        %v1312 = vld [vmem:[%s1311] sm:$0x1]
        %v1313 = vsel %vm719, %v1307, 0.0
        %1314 = vadd.xlane.f32.xlu0 %v1313
        %v1315 = vpop.xlane.xlu0 %1314
        %v1316 = vsel %vm719, %v1308, 0.0
        %1317 = vadd.xlane.f32.xlu0 %v1316
        %v1318 = vpop.xlane.xlu0 %1317
        %v1319 = vmul.f32 %v1315, %v726
        %v1320 = vmul.f32 %v1318, %v726
        %v1321 = vsub.f32 %v1307, %v1319
        %v1322 = vsub.f32 %v1308, %v1320
        %v1323 = vmul.f32 %v1321, %v1321
        %v1324 = vmul.f32 %v1322, %v1322
        %v1325 = vsel %vm719, %v1323, 0.0
        %1326 = vadd.xlane.f32.xlu0 %v1325
        %v1327 = vpop.xlane.xlu0 %1326
        %v1328 = vsel %vm719, %v1324, 0.0
        %1329 = vadd.xlane.f32.xlu0 %v1328
        %v1330 = vpop.xlane.xlu0 %1329
        %v1331 = vmul.f32 %v1327, %v726
        %v1332 = vmul.f32 %v1330, %v726
        %v1333 = vadd.f32 %v1331, 1e-06
        %v1334 = vadd.f32 %v1332, 1e-06
        %v1335 = vrsqrt.pop %v1333
        %v1336 = vrsqrt.pop %v1334
        %v1337 = vmul.f32 %v1321, %v1335
        %v1338 = vmul.f32 %v1322, %v1336
        %v1340 = vlaneseq
        %v1341 = vshrl.u32 %v1340, 7
        %v1342 = vsub.s32 0, %v1341
        %v1343 = vrot.slane %v1310, %v1342
        %v1345 = vmul.f32 %v1337, %v1343
        %v1346 = vmul.f32 %v1338, %v1343
        %v1348 = vlaneseq
        %v1349 = vshrl.u32 %v1348, 7
        %v1350 = vsub.s32 0, %v1349
        %v1351 = vrot.slane %v1312, %v1350
        %v1353 = vadd.f32 %v1345, %v1351
        %v1354 = vadd.f32 %v1346, %v1351
        %s1355 = scalar_lea.vmem %s5, 16
        %v1356 = vld [vmem:[%s1355] sm:$0xff]
        %v1357 = vld [vmem:[%s1355 + $0x8] sm:$0xff]
        %s1358 = scalar_lea.vmem %s6, 1
        %v1359 = vld [vmem:[%s1358] sm:$0x1]
        %v1361 = vlaneseq
        %v1362 = vshrl.u32 %v1361, 7
        %v1363 = vsub.s32 0, %v1362
        %v1364 = vrot.slane %v1359, %v1363
        %1366 = vxpose.xlu0.b32.start [1/16] %v1353, 128
        %1367 = vxpose.xlu0.b32.cont [2/16] %v1354, 128
        %1368 = vxpose.xlu0.b32.cont [3/16] 0.0, 128
        %1369 = vxpose.xlu0.b32.cont [4/16] 0.0, 128
        %1370 = vxpose.xlu0.b32.cont [5/16] 0.0, 128
        %1371 = vxpose.xlu0.b32.cont [6/16] 0.0, 128
        %1372 = vxpose.xlu0.b32.cont [7/16] 0.0, 128
        %1373 = vxpose.xlu0.b32.cont [8/16] 0.0, 128
        %1374 = vxpose.xlu0.b32.cont [9/16] 0.0, 128
        %1375 = vxpose.xlu0.b32.cont [10/16] 0.0, 128
        %1376 = vxpose.xlu0.b32.cont [11/16] 0.0, 128
        %1377 = vxpose.xlu0.b32.cont [12/16] 0.0, 128
        %1378 = vxpose.xlu0.b32.cont [13/16] 0.0, 128
        %1379 = vxpose.xlu0.b32.cont [14/16] 0.0, 128
        %1380 = vxpose.xlu0.b32.cont [15/16] 0.0, 128
        %1381 = vxpose.xlu0.b32.end [16/16] 0.0, 128
        %v1382 = vpop.trf.xlu0
        %v1383 = vpop.trf.xlu0
        %v1384 = vpop.trf.xlu0
        %v1385 = vpop.trf.xlu0
        %v1386 = vpop.trf.xlu0
        %v1387 = vpop.trf.xlu0
        %v1388 = vpop.trf.xlu0
        %v1389 = vpop.trf.xlu0
        %v1390 = vpop.trf.xlu0
        %v1391 = vpop.trf.xlu0
        %v1392 = vpop.trf.xlu0
        %v1393 = vpop.trf.xlu0
        %v1394 = vpop.trf.xlu0
        %v1395 = vpop.trf.xlu0
        %v1396 = vpop.trf.xlu0
        %v1397 = vpop.trf.xlu0
        %v1399 = vsel %vm804, %v1382, 0
        %v1402 = vsel %vm804, %v1383, 0
        %v1405 = vsel %vm804, %v1384, 0
        %v1408 = vsel %vm804, %v1385, 0
        %1410 = vmatprep.subr.mxu0 0.0
        %1411 = vmatpush1.msra.mxu0 %v1356
        %1412 = vmatprep.subr.mxu0 0.0
        %1413 = vmatpush1.msra.mxu0 %v1357
        %1414 = vmatprep.subr.mxu0 0.0
        %1415 = vmatpush1.msra.mxu0 0.0
        %1416 = vmatprep.subr.mxu0 0.0
        %1417 = vmatpush1.msra.mxu0 0.0
        %1418 = vmatprep.subr.mxu0 0.0
        %1419 = vmatpush1.msra.mxu0 0.0
        %1420 = vmatprep.subr.mxu0 0.0
        %1421 = vmatpush1.msra.mxu0 0.0
        %1422 = vmatprep.subr.mxu0 0.0
        %1423 = vmatpush1.msra.mxu0 0.0
        %1424 = vmatprep.subr.mxu0 0.0
        %1425 = vmatpush1.msra.mxu0 0.0
        %1426 = vmatprep.subr.mxu0 0.0
        %1427 = vmatpush1.msra.mxu0 0.0
        %1428 = vmatprep.subr.mxu0 0.0
        %1429 = vmatpush1.msra.mxu0 0.0
        %1430 = vmatprep.subr.mxu0 0.0
        %1431 = vmatpush1.msra.mxu0 0.0
        %1432 = vmatprep.subr.mxu0 0.0
        %1433 = vmatpush1.msra.mxu0 0.0
        %1434 = vmatprep.subr.mxu0 0.0
        %1435 = vmatpush1.msra.mxu0 0.0
        %1436 = vmatprep.subr.mxu0 0.0
        %1437 = vmatpush1.msra.mxu0 0.0
        %1438 = vmatprep.subr.mxu0 0.0
        %1439 = vmatpush1.msra.mxu0 0.0
        %1440 = vmatprep.subr.mxu0 0.0
        %1441 = vmatpush1.msra.mxu0 0.0
        %1442 = vmatprep.subr.mxu0 0.0
        %1443 = vmatpush1.msra.mxu0 0.0
        %1444 = vmatprep.subr.mxu0 0.0
        %1445 = vmatpush1.msra.mxu0 0.0
        %1446 = vmatprep.subr.mxu0 0.0
        %1447 = vmatpush1.msra.mxu0 0.0
        %1448 = vmatprep.subr.mxu0 0.0
        %1449 = vmatpush1.msra.mxu0 0.0
        %1450 = vmatprep.subr.mxu0 0.0
        %1451 = vmatpush1.msra.mxu0 0.0
        %1452 = vmatprep.subr.mxu0 0.0
        %1453 = vmatpush1.msra.mxu0 0.0
        %1454 = vmatprep.subr.mxu0 0.0
        %1455 = vmatpush1.msra.mxu0 0.0
        %1456 = vmatprep.subr.mxu0 0.0
        %1457 = vmatpush1.msra.mxu0 0.0
        %1458 = vmatprep.subr.mxu0 0.0
        %1459 = vmatpush1.msra.mxu0 0.0
        %1460 = vmatprep.subr.mxu0 0.0
        %1461 = vmatpush1.msra.mxu0 0.0
        %1462 = vmatprep.subr.mxu0 0.0
        %1463 = vmatpush1.msra.mxu0 0.0
        %1464 = vmatprep.subr.mxu0 0.0
        %1465 = vmatpush1.msra.mxu0 0.0
        %1466 = vmatprep.subr.mxu0 0.0
        %1467 = vmatpush1.msra.mxu0 0.0
        %1468 = vmatprep.subr.mxu0 0.0
        %1469 = vmatpush1.msra.mxu0 0.0
        %1470 = vmatprep.subr.mxu0 0.0
        %1471 = vmatpush1.msra.mxu0 0.0
        %1472 = vmatprep.subr.mxu0 0.0
        %1473 = vmatpush1.msra.mxu0 0.0
        %1474 = vmatprep.mubr.f32.mxu0 0.0
        %1475 = vmatmul.mubr.f32.gmra.mrb[0].mxu0 %v1399
        %v1476 = vpop.f32.mrb[0].mxu0
        %v1477 = vadd.f32 %v1364, %v1476
        %v1478 = vpop.f32.mrb[0].mxu0
        %1479 = vmatprep.mubr.f32.mxu0 0.0
        %1480 = vmatmul.mubr.f32.gmra.mrb[0].mxu0 %v1402
        %v1481 = vpop.f32.mrb[0].mxu0
        %v1482 = vadd.f32 %v1364, %v1481
        %v1483 = vpop.f32.mrb[0].mxu0
        %1484 = vmatprep.mubr.f32.mxu0 0.0
        %1485 = vmatmul.mubr.f32.gmra.mrb[0].mxu0 %v1405
        %v1486 = vpop.f32.mrb[0].mxu0
        %v1487 = vadd.f32 %v1364, %v1486
        %v1488 = vpop.f32.mrb[0].mxu0
        %1489 = vmatprep.mubr.f32.mxu0 0.0
        %1490 = vmatmul.mubr.f32.gmra.mrb[0].mxu0 %v1408
        %v1491 = vpop.f32.mrb[0].mxu0
        %v1492 = vadd.f32 %v1364, %v1491
        %v1493 = vpop.f32.mrb[0].mxu0
        %1494 = vdwg.mxu0
        %v1495 = vmul.f32 %v1477, 0.5
        %v1496 = vmul.f32 %v1482, 0.5
        %v1497 = vmul.f32 %v1487, 0.5
        %v1498 = vmul.f32 %v1492, 0.5
        %v1499 = vmul.f32 %v1477, 0.70710677
        %v1500 = vmul.f32 %v1482, 0.70710677
        %v1501 = vmul.f32 %v1487, 0.70710677
        %v1502 = vmul.f32 %v1492, 0.70710677
        %v1503 = verf.f32.pop %v1499
        %v1504 = verf.f32.pop %v1500
        %v1505 = verf.f32.pop %v1501
        %v1506 = verf.f32.pop %v1502
        %v1507 = vadd.f32 %v1503, 1.0
        %v1508 = vadd.f32 %v1504, 1.0
        %v1509 = vadd.f32 %v1505, 1.0
        %v1510 = vadd.f32 %v1506, 1.0
        %v1511 = vmul.f32 %v1495, %v1507
        %v1512 = vmul.f32 %v1496, %v1508
        %v1513 = vmul.f32 %v1497, %v1509
        %v1514 = vmul.f32 %v1498, %v1510
        %s1515 = scalar_lea.vmem %s7, 16
        %v1516 = vld [vmem:[%s1515] sm:$0xff]
        %v1517 = vld [vmem:[%s1515 + $0x8] sm:$0xff]
        %1518 = vxpose.xlu0.b32.start [1/16] %v1516, 128
        %1519 = vxpose.xlu0.b32.cont [2/16] %v1517, 128
        %1520 = vxpose.xlu0.b32.cont [3/16] 0.0, 128
        %1521 = vxpose.xlu0.b32.cont [4/16] 0.0, 128
        %1522 = vxpose.xlu0.b32.cont [5/16] 0.0, 128
        %1523 = vxpose.xlu0.b32.cont [6/16] 0.0, 128
        %1524 = vxpose.xlu0.b32.cont [7/16] 0.0, 128
        %1525 = vxpose.xlu0.b32.cont [8/16] 0.0, 128
        %1526 = vxpose.xlu0.b32.cont [9/16] 0.0, 128
        %1527 = vxpose.xlu0.b32.cont [10/16] 0.0, 128
        %1528 = vxpose.xlu0.b32.cont [11/16] 0.0, 128
        %1529 = vxpose.xlu0.b32.cont [12/16] 0.0, 128
        %1530 = vxpose.xlu0.b32.cont [13/16] 0.0, 128
        %1531 = vxpose.xlu0.b32.cont [14/16] 0.0, 128
        %1532 = vxpose.xlu0.b32.cont [15/16] 0.0, 128
        %1533 = vxpose.xlu0.b32.end [16/16] 0.0, 128
        %v1534 = vpop.trf.xlu0
        %v1535 = vpop.trf.xlu0
        %v1536 = vpop.trf.xlu0
        %v1537 = vpop.trf.xlu0
        %v1538 = vpop.trf.xlu0
        %v1539 = vpop.trf.xlu0
        %v1540 = vpop.trf.xlu0
        %v1541 = vpop.trf.xlu0
        %v1542 = vpop.trf.xlu0
        %v1543 = vpop.trf.xlu0
        %v1544 = vpop.trf.xlu0
        %v1545 = vpop.trf.xlu0
        %v1546 = vpop.trf.xlu0
        %v1547 = vpop.trf.xlu0
        %v1548 = vpop.trf.xlu0
        %v1549 = vpop.trf.xlu0
        %v1551 = vsel %vm804, %v1534, 0
        %v1554 = vsel %vm804, %v1535, 0
        %v1557 = vsel %vm804, %v1511, 0
        %v1560 = vsel %vm804, %v1512, 0
        %v1563 = vsel %vm804, %v1513, 0
        %v1566 = vsel %vm804, %v1514, 0
        %1568 = vmatprep.subr.mxu0 0.0
        %1569 = vmatpush1.xpose.msra.mxu0 %v1557
        %1570 = vmatprep.subr.mxu0 0.0
        %1571 = vmatpush1.xpose.msra.mxu0 %v1560
        %1572 = vmatprep.subr.mxu0 0.0
        %1573 = vmatpush1.xpose.msra.mxu0 %v1563
        %1574 = vmatprep.subr.mxu0 0.0
        %1575 = vmatpush1.xpose.msra.mxu0 %v1566
        %1576 = vmatprep.subr.mxu0 0.0
        %1577 = vmatpush1.xpose.msra.mxu0 0.0
        %1578 = vmatprep.subr.mxu0 0.0
        %1579 = vmatpush1.xpose.msra.mxu0 0.0
        %1580 = vmatprep.subr.mxu0 0.0
        %1581 = vmatpush1.xpose.msra.mxu0 0.0
        %1582 = vmatprep.subr.mxu0 0.0
        %1583 = vmatpush1.xpose.msra.mxu0 0.0
        %1584 = vmatprep.subr.mxu0 0.0
        %1585 = vmatpush1.xpose.msra.mxu0 0.0
        %1586 = vmatprep.subr.mxu0 0.0
        %1587 = vmatpush1.xpose.msra.mxu0 0.0
        %1588 = vmatprep.subr.mxu0 0.0
        %1589 = vmatpush1.xpose.msra.mxu0 0.0
        %1590 = vmatprep.subr.mxu0 0.0
        %1591 = vmatpush1.xpose.msra.mxu0 0.0
        %1592 = vmatprep.subr.mxu0 0.0
        %1593 = vmatpush1.xpose.msra.mxu0 0.0
        %1594 = vmatprep.subr.mxu0 0.0
        %1595 = vmatpush1.xpose.msra.mxu0 0.0
        %1596 = vmatprep.subr.mxu0 0.0
        %1597 = vmatpush1.xpose.msra.mxu0 0.0
        %1598 = vmatprep.subr.mxu0 0.0
        %1599 = vmatpush1.xpose.msra.mxu0 0.0
        %1600 = vmatprep.subr.mxu0 0.0
        %1601 = vmatpush1.xpose.msra.mxu0 0.0
        %1602 = vmatprep.subr.mxu0 0.0
        %1603 = vmatpush1.xpose.msra.mxu0 0.0
        %1604 = vmatprep.subr.mxu0 0.0
        %1605 = vmatpush1.xpose.msra.mxu0 0.0
        %1606 = vmatprep.subr.mxu0 0.0
        %1607 = vmatpush1.xpose.msra.mxu0 0.0
        %1608 = vmatprep.subr.mxu0 0.0
        %1609 = vmatpush1.xpose.msra.mxu0 0.0
        %1610 = vmatprep.subr.mxu0 0.0
        %1611 = vmatpush1.xpose.msra.mxu0 0.0
        %1612 = vmatprep.subr.mxu0 0.0
        %1613 = vmatpush1.xpose.msra.mxu0 0.0
        %1614 = vmatprep.subr.mxu0 0.0
        %1615 = vmatpush1.xpose.msra.mxu0 0.0
        %1616 = vmatprep.subr.mxu0 0.0
        %1617 = vmatpush1.xpose.msra.mxu0 0.0
        %1618 = vmatprep.subr.mxu0 0.0
        %1619 = vmatpush1.xpose.msra.mxu0 0.0
        %1620 = vmatprep.subr.mxu0 0.0
        %1621 = vmatpush1.xpose.msra.mxu0 0.0
        %1622 = vmatprep.subr.mxu0 0.0
        %1623 = vmatpush1.xpose.msra.mxu0 0.0
        %1624 = vmatprep.subr.mxu0 0.0
        %1625 = vmatpush1.xpose.msra.mxu0 0.0
        %1626 = vmatprep.subr.mxu0 0.0
        %1627 = vmatpush1.xpose.msra.mxu0 0.0
        %1628 = vmatprep.subr.mxu0 0.0
        %1629 = vmatpush1.xpose.msra.mxu0 0.0
        %1630 = vmatprep.subr.mxu0 0.0
        %1631 = vmatpush1.xpose.msra.mxu0 0.0
        %1632 = vmatprep.mubr.f32.mxu0 0.0
        %1633 = vmatmul.mubr.f32.gmra.mrb[0].mxu0 %v1551
        %v1634 = vpop.f32.mrb[0].mxu0
        %v1635 = vadd.f32 0.0, %v1634
        %v1636 = vpop.f32.mrb[0].mxu0
        %1637 = vmatprep.mubr.f32.mxu0 0.0
        %1638 = vmatmul.mubr.f32.gmra.mrb[0].mxu0 %v1554
        %v1639 = vpop.f32.mrb[0].mxu0
        %v1640 = vadd.f32 0.0, %v1639
        %v1641 = vpop.f32.mrb[0].mxu0
        %1642 = vdwg.mxu0
        %v1643 = vadd.f32 %v1307, %v1635
        %v1644 = vadd.f32 %v1308, %v1640
        %s1645 = scalar_lea.vmem %s8, 16
        %v1646 = vld [vmem:[%s1645] sm:$0xff]
        %v1647 = vld [vmem:[%s1645 + $0x8] sm:$0xff]
        %1649 = vset.pattern.permute.xlu0 0
        %1650 = vperm.xlu0 %1649, %v1646
        %v1651 = vpop.permute.xlu0 %1650
        %1654 = vset.pattern.permute.xlu0 0
        %1655 = vperm.xlu0 %1654, %v1647
        %v1656 = vpop.permute.xlu0 %1655
        %v1658 = vadd.f32 %v1643, %v1651
        %v1659 = vadd.f32 %v1644, %v1656
        %s1660 = scalar_lea.vmem %s9, 1
        %v1661 = vld [vmem:[%s1660] sm:$0x1]
        %s1662 = scalar_lea.vmem %s10, 1
        %v1663 = vld [vmem:[%s1662] sm:$0x1]
        %v1664 = vsel %vm719, %v1658, 0.0
        %1665 = vadd.xlane.f32.xlu0 %v1664
        %v1666 = vpop.xlane.xlu0 %1665
        %v1667 = vsel %vm719, %v1659, 0.0
        %1668 = vadd.xlane.f32.xlu0 %v1667
        %v1669 = vpop.xlane.xlu0 %1668
        %v1670 = vmul.f32 %v1666, %v726
        %v1671 = vmul.f32 %v1669, %v726
        %v1672 = vsub.f32 %v1658, %v1670
        %v1673 = vsub.f32 %v1659, %v1671
        %v1674 = vmul.f32 %v1672, %v1672
        %v1675 = vmul.f32 %v1673, %v1673
        %v1676 = vsel %vm719, %v1674, 0.0
        %1677 = vadd.xlane.f32.xlu0 %v1676
        %v1678 = vpop.xlane.xlu0 %1677
        %v1679 = vsel %vm719, %v1675, 0.0
        %1680 = vadd.xlane.f32.xlu0 %v1679
        %v1681 = vpop.xlane.xlu0 %1680
        %v1682 = vmul.f32 %v1678, %v726
        %v1683 = vmul.f32 %v1681, %v726
        %v1684 = vadd.f32 %v1682, 1e-06
        %v1685 = vadd.f32 %v1683, 1e-06
        %v1686 = vrsqrt.pop %v1684
        %v1687 = vrsqrt.pop %v1685
        %v1688 = vmul.f32 %v1672, %v1686
        %v1689 = vmul.f32 %v1673, %v1687
        %v1691 = vlaneseq
        %v1692 = vshrl.u32 %v1691, 7
        %v1693 = vsub.s32 0, %v1692
        %v1694 = vrot.slane %v1661, %v1693
        %v1696 = vmul.f32 %v1688, %v1694
        %v1697 = vmul.f32 %v1689, %v1694
        %v1699 = vlaneseq
        %v1700 = vshrl.u32 %v1699, 7
        %v1701 = vsub.s32 0, %v1700
        %v1702 = vrot.slane %v1663, %v1701
        %v1704 = vadd.f32 %v1696, %v1702
        %v1705 = vadd.f32 %v1697, %v1702
        %s1706 = scalar_lea.vmem %s11, 32
        %v1707 = vld [vmem:[%s1706] sm:$0xff]
        %v1708 = vld [vmem:[%s1706 + $0x8] sm:$0xff]
        %v1709 = vld [vmem:[%s1706 + $0x10] sm:$0xff]
        %v1710 = vld [vmem:[%s1706 + $0x18] sm:$0xff]
        %s1711 = scalar_lea.vmem %s12, 1
        %v1712 = vld [vmem:[%s1711] sm:$0x1]
        %v1714 = vlaneseq
        %v1715 = vshrl.u32 %v1714, 7
        %v1716 = vsub.s32 0, %v1715
        %v1717 = vrot.slane %v1712, %v1716
        %v1720 = vsel %vm719, %v1704, 0
        %v1723 = vsel %vm719, %v1705, 0
        %1725 = vmatprep.subr.mxu0 0.0
        %1726 = vmatpush1.msra.mxu0 %v1707
        %1727 = vmatprep.subr.mxu0 0.0
        %1728 = vmatpush1.msra.mxu0 %v1708
        %1729 = vmatprep.subr.mxu0 0.0
        %1730 = vmatpush1.msra.mxu0 %v1709
        %1731 = vmatprep.subr.mxu0 0.0
        %1732 = vmatpush1.msra.mxu0 %v1710
        %1733 = vmatprep.subr.mxu0 0.0
        %1734 = vmatpush1.msra.mxu0 0.0
        %1735 = vmatprep.subr.mxu0 0.0
        %1736 = vmatpush1.msra.mxu0 0.0
        %1737 = vmatprep.subr.mxu0 0.0
        %1738 = vmatpush1.msra.mxu0 0.0
        %1739 = vmatprep.subr.mxu0 0.0
        %1740 = vmatpush1.msra.mxu0 0.0
        %1741 = vmatprep.subr.mxu0 0.0
        %1742 = vmatpush1.msra.mxu0 0.0
        %1743 = vmatprep.subr.mxu0 0.0
        %1744 = vmatpush1.msra.mxu0 0.0
        %1745 = vmatprep.subr.mxu0 0.0
        %1746 = vmatpush1.msra.mxu0 0.0
        %1747 = vmatprep.subr.mxu0 0.0
        %1748 = vmatpush1.msra.mxu0 0.0
        %1749 = vmatprep.subr.mxu0 0.0
        %1750 = vmatpush1.msra.mxu0 0.0
        %1751 = vmatprep.subr.mxu0 0.0
        %1752 = vmatpush1.msra.mxu0 0.0
        %1753 = vmatprep.subr.mxu0 0.0
        %1754 = vmatpush1.msra.mxu0 0.0
        %1755 = vmatprep.subr.mxu0 0.0
        %1756 = vmatpush1.msra.mxu0 0.0
        %1757 = vmatprep.subr.mxu0 0.0
        %1758 = vmatpush1.msra.mxu0 0.0
        %1759 = vmatprep.subr.mxu0 0.0
        %1760 = vmatpush1.msra.mxu0 0.0
        %1761 = vmatprep.subr.mxu0 0.0
        %1762 = vmatpush1.msra.mxu0 0.0
        %1763 = vmatprep.subr.mxu0 0.0
        %1764 = vmatpush1.msra.mxu0 0.0
        %1765 = vmatprep.subr.mxu0 0.0
        %1766 = vmatpush1.msra.mxu0 0.0
        %1767 = vmatprep.subr.mxu0 0.0
        %1768 = vmatpush1.msra.mxu0 0.0
        %1769 = vmatprep.subr.mxu0 0.0
        %1770 = vmatpush1.msra.mxu0 0.0
        %1771 = vmatprep.subr.mxu0 0.0
        %1772 = vmatpush1.msra.mxu0 0.0
        %1773 = vmatprep.subr.mxu0 0.0
        %1774 = vmatpush1.msra.mxu0 0.0
        %1775 = vmatprep.subr.mxu0 0.0
        %1776 = vmatpush1.msra.mxu0 0.0
        %1777 = vmatprep.subr.mxu0 0.0
        %1778 = vmatpush1.msra.mxu0 0.0
        %1779 = vmatprep.subr.mxu0 0.0
        %1780 = vmatpush1.msra.mxu0 0.0
        %1781 = vmatprep.subr.mxu0 0.0
        %1782 = vmatpush1.msra.mxu0 0.0
        %1783 = vmatprep.subr.mxu0 0.0
        %1784 = vmatpush1.msra.mxu0 0.0
        %1785 = vmatprep.subr.mxu0 0.0
        %1786 = vmatpush1.msra.mxu0 0.0
        %1787 = vmatprep.subr.mxu0 0.0
        %1788 = vmatpush1.msra.mxu0 0.0
        %1789 = vmatprep.mubr.f32.mxu0 0.0
        %1790 = vmatmul.mubr.f32.gmra.mrb[0].mxu0 %v1720
        %v1791 = vpop.f32.mrb[0].mxu0
        %v1792 = vadd.f32 %v1717, %v1791
        %v1793 = vpop.f32.mrb[0].mxu0
        %1794 = vmatprep.mubr.f32.mxu0 0.0
        %1795 = vmatmul.mubr.f32.gmra.mrb[0].mxu0 %v1723
        %v1796 = vpop.f32.mrb[0].mxu0
        %v1797 = vadd.f32 %v1717, %v1796
        %v1798 = vpop.f32.mrb[0].mxu0
        %1799 = vdwg.mxu0
        %v1800 = vmul.f32 %v1792, 0.5
        %v1801 = vmul.f32 %v1797, 0.5
        %v1802 = vmul.f32 %v1792, 0.70710677
        %v1803 = vmul.f32 %v1797, 0.70710677
        %v1804 = verf.f32.pop %v1802
        %v1805 = verf.f32.pop %v1803
        %v1806 = vadd.f32 %v1804, 1.0
        %v1807 = vadd.f32 %v1805, 1.0
        %v1808 = vmul.f32 %v1800, %v1806
        %v1809 = vmul.f32 %v1801, %v1807
        %s1810 = scalar_lea.vmem %s13, 64
        %v1811 = vld [vmem:[%s1810] sm:$0xff]
        %v1812 = vld [vmem:[%s1810 + $0x8] sm:$0xff]
        %v1813 = vld [vmem:[%s1810 + $0x10] sm:$0xff]
        %v1814 = vld [vmem:[%s1810 + $0x18] sm:$0xff]
        %v1815 = vld [vmem:[%s1810 + $0x20] sm:$0xff]
        %v1816 = vld [vmem:[%s1810 + $0x28] sm:$0xff]
        %v1817 = vld [vmem:[%s1810 + $0x30] sm:$0xff]
        %v1818 = vld [vmem:[%s1810 + $0x38] sm:$0xff]
        %s1819 = scalar_lea.vmem %s14, 1
        %v1820 = vld [vmem:[%s1819] sm:$0x1]
        %v1822 = vlaneseq
        %v1823 = vshrl.u32 %v1822, 7
        %v1824 = vsub.s32 0, %v1823
        %v1825 = vrot.slane %v1820, %v1824
        %v1828 = vsel %vm635, %v1808, 0
        %v1831 = vsel %vm635, %v1809, 0
        %1833 = vmatprep.subr.mxu0 0.0
        %1834 = vmatpush1.msra.mxu0 %v1811
        %1835 = vmatprep.subr.mxu0 0.0
        %1836 = vmatpush1.msra.mxu0 %v1812
        %1837 = vmatprep.subr.mxu0 0.0
        %1838 = vmatpush1.msra.mxu0 %v1813
        %1839 = vmatprep.subr.mxu0 0.0
        %1840 = vmatpush1.msra.mxu0 %v1814
        %1841 = vmatprep.subr.mxu0 0.0
        %1842 = vmatpush1.msra.mxu0 %v1815
        %1843 = vmatprep.subr.mxu0 0.0
        %1844 = vmatpush1.msra.mxu0 %v1816
        %1845 = vmatprep.subr.mxu0 0.0
        %1846 = vmatpush1.msra.mxu0 %v1817
        %1847 = vmatprep.subr.mxu0 0.0
        %1848 = vmatpush1.msra.mxu0 %v1818
        %1849 = vmatprep.subr.mxu0 0.0
        %1850 = vmatpush1.msra.mxu0 0.0
        %1851 = vmatprep.subr.mxu0 0.0
        %1852 = vmatpush1.msra.mxu0 0.0
        %1853 = vmatprep.subr.mxu0 0.0
        %1854 = vmatpush1.msra.mxu0 0.0
        %1855 = vmatprep.subr.mxu0 0.0
        %1856 = vmatpush1.msra.mxu0 0.0
        %1857 = vmatprep.subr.mxu0 0.0
        %1858 = vmatpush1.msra.mxu0 0.0
        %1859 = vmatprep.subr.mxu0 0.0
        %1860 = vmatpush1.msra.mxu0 0.0
        %1861 = vmatprep.subr.mxu0 0.0
        %1862 = vmatpush1.msra.mxu0 0.0
        %1863 = vmatprep.subr.mxu0 0.0
        %1864 = vmatpush1.msra.mxu0 0.0
        %1865 = vmatprep.subr.mxu0 0.0
        %1866 = vmatpush1.msra.mxu0 0.0
        %1867 = vmatprep.subr.mxu0 0.0
        %1868 = vmatpush1.msra.mxu0 0.0
        %1869 = vmatprep.subr.mxu0 0.0
        %1870 = vmatpush1.msra.mxu0 0.0
        %1871 = vmatprep.subr.mxu0 0.0
        %1872 = vmatpush1.msra.mxu0 0.0
        %1873 = vmatprep.subr.mxu0 0.0
        %1874 = vmatpush1.msra.mxu0 0.0
        %1875 = vmatprep.subr.mxu0 0.0
        %1876 = vmatpush1.msra.mxu0 0.0
        %1877 = vmatprep.subr.mxu0 0.0
        %1878 = vmatpush1.msra.mxu0 0.0
        %1879 = vmatprep.subr.mxu0 0.0
        %1880 = vmatpush1.msra.mxu0 0.0
        %1881 = vmatprep.subr.mxu0 0.0
        %1882 = vmatpush1.msra.mxu0 0.0
        %1883 = vmatprep.subr.mxu0 0.0
        %1884 = vmatpush1.msra.mxu0 0.0
        %1885 = vmatprep.subr.mxu0 0.0
        %1886 = vmatpush1.msra.mxu0 0.0
        %1887 = vmatprep.subr.mxu0 0.0
        %1888 = vmatpush1.msra.mxu0 0.0
        %1889 = vmatprep.subr.mxu0 0.0
        %1890 = vmatpush1.msra.mxu0 0.0
        %1891 = vmatprep.subr.mxu0 0.0
        %1892 = vmatpush1.msra.mxu0 0.0
        %1893 = vmatprep.subr.mxu0 0.0
        %1894 = vmatpush1.msra.mxu0 0.0
        %1895 = vmatprep.subr.mxu0 0.0
        %1896 = vmatpush1.msra.mxu0 0.0
        %1897 = vmatprep.mubr.f32.mxu0 0.0
        %1898 = vmatmul.mubr.f32.gmra.mrb[0].mxu0 %v1828
        %v1899 = vpop.f32.mrb[0].mxu0
        %v1900 = vadd.f32 %v1825, %v1899
        %v1901 = vpop.f32.mrb[0].mxu0
        %1902 = vmatprep.mubr.f32.mxu0 0.0
        %1903 = vmatmul.mubr.f32.gmra.mrb[0].mxu0 %v1831
        %v1904 = vpop.f32.mrb[0].mxu0
        %v1905 = vadd.f32 %v1825, %v1904
        %v1906 = vpop.f32.mrb[0].mxu0
        %1907 = vdwg.mxu0
        %v1908 = vadd.f32 %v1658, %v1900
        %v1909 = vadd.f32 %v1659, %v1905
        %v1910 = vld [vmem:[%s15] sm:$0x1]
        %v1911 = vld [vmem:[%s16] sm:$0x1]
        %v1912 = vsel %vm719, %v1908, 0.0
        %1913 = vadd.xlane.f32.xlu0 %v1912
        %v1914 = vpop.xlane.xlu0 %1913
        %v1915 = vsel %vm719, %v1909, 0.0
        %1916 = vadd.xlane.f32.xlu0 %v1915
        %v1917 = vpop.xlane.xlu0 %1916
        %v1918 = vmul.f32 %v1914, %v726
        %v1919 = vmul.f32 %v1917, %v726
        %v1920 = vsub.f32 %v1908, %v1918
        %v1921 = vsub.f32 %v1909, %v1919
        %v1922 = vmul.f32 %v1920, %v1920
        %v1923 = vmul.f32 %v1921, %v1921
        %v1924 = vsel %vm719, %v1922, 0.0
        %1925 = vadd.xlane.f32.xlu0 %v1924
        %v1926 = vpop.xlane.xlu0 %1925
        %v1927 = vsel %vm719, %v1923, 0.0
        %1928 = vadd.xlane.f32.xlu0 %v1927
        %v1929 = vpop.xlane.xlu0 %1928
        %v1930 = vmul.f32 %v1926, %v726
        %v1931 = vmul.f32 %v1929, %v726
        %v1932 = vadd.f32 %v1930, 1e-06
        %v1933 = vadd.f32 %v1931, 1e-06
        %v1934 = vrsqrt.pop %v1932
        %v1935 = vrsqrt.pop %v1933
        %v1936 = vmul.f32 %v1920, %v1934
        %v1937 = vmul.f32 %v1921, %v1935
        %v1939 = vlaneseq
        %v1940 = vshrl.u32 %v1939, 7
        %v1941 = vsub.s32 0, %v1940
        %v1942 = vrot.slane %v1910, %v1941
        %v1944 = vmul.f32 %v1936, %v1942
        %v1945 = vmul.f32 %v1937, %v1942
        %v1947 = vlaneseq
        %v1948 = vshrl.u32 %v1947, 7
        %v1949 = vsub.s32 0, %v1948
        %v1950 = vrot.slane %v1911, %v1949
        %v1952 = vadd.f32 %v1944, %v1950
        %v1953 = vadd.f32 %v1945, %v1950
        %v1954 = vsel %vm719, %v1952, 0.0
        %v1955 = vsel %vm719, %v1953, 0.0
        %v1956 = vadd.f32 %v1954, %v1955
        %v1957 = vrot.slane %v1956, 4
        %v1958 = vadd.f32 %v1956, %v1957
        %v1959 = vrot.slane %v1958, 2
        %v1960 = vadd.f32 %v1958, %v1959
        %v1961 = vrot.slane %v1960, 1
        %v1962 = vadd.f32 %v1960, %v1961
        %v1963 = vrcp.pop 16.0
        %v1964 = vmul.f32 %v1962, %v1963
        %v1965 = vld [vmem:[%s17] sm:$0xff]
        %v1966 = vld [vmem:[%s17 + $0x8] sm:$0xff]
        %v1967 = vld [vmem:[%s17 + $0x10] sm:$0xff]
        %v1968 = vld [vmem:[%s17 + $0x18] sm:$0xff]
        %v1969 = vld [vmem:[%s18] sm:$0x1]
        %v1971 = vsel %vm719, %v1964, 0
        %1973 = vmatprep.subr.mxu0 0.0
        %1974 = vmatpush1.msra.mxu0 %v1965
        %1975 = vmatprep.subr.mxu0 0.0
        %1976 = vmatpush1.msra.mxu0 %v1966
        %1977 = vmatprep.subr.mxu0 0.0
        %1978 = vmatpush1.msra.mxu0 %v1967
        %1979 = vmatprep.subr.mxu0 0.0
        %1980 = vmatpush1.msra.mxu0 %v1968
        %1981 = vmatprep.subr.mxu0 0.0
        %1982 = vmatpush1.msra.mxu0 0.0
        %1983 = vmatprep.subr.mxu0 0.0
        %1984 = vmatpush1.msra.mxu0 0.0
        %1985 = vmatprep.subr.mxu0 0.0
        %1986 = vmatpush1.msra.mxu0 0.0
        %1987 = vmatprep.subr.mxu0 0.0
        %1988 = vmatpush1.msra.mxu0 0.0
        %1989 = vmatprep.subr.mxu0 0.0
        %1990 = vmatpush1.msra.mxu0 0.0
        %1991 = vmatprep.subr.mxu0 0.0
        %1992 = vmatpush1.msra.mxu0 0.0
        %1993 = vmatprep.subr.mxu0 0.0
        %1994 = vmatpush1.msra.mxu0 0.0
        %1995 = vmatprep.subr.mxu0 0.0
        %1996 = vmatpush1.msra.mxu0 0.0
        %1997 = vmatprep.subr.mxu0 0.0
        %1998 = vmatpush1.msra.mxu0 0.0
        %1999 = vmatprep.subr.mxu0 0.0
        %2000 = vmatpush1.msra.mxu0 0.0
        %2001 = vmatprep.subr.mxu0 0.0
        %2002 = vmatpush1.msra.mxu0 0.0
        %2003 = vmatprep.subr.mxu0 0.0
        %2004 = vmatpush1.msra.mxu0 0.0
        %2005 = vmatprep.subr.mxu0 0.0
        %2006 = vmatpush1.msra.mxu0 0.0
        %2007 = vmatprep.subr.mxu0 0.0
        %2008 = vmatpush1.msra.mxu0 0.0
        %2009 = vmatprep.subr.mxu0 0.0
        %2010 = vmatpush1.msra.mxu0 0.0
        %2011 = vmatprep.subr.mxu0 0.0
        %2012 = vmatpush1.msra.mxu0 0.0
        %2013 = vmatprep.subr.mxu0 0.0
        %2014 = vmatpush1.msra.mxu0 0.0
        %2015 = vmatprep.subr.mxu0 0.0
        %2016 = vmatpush1.msra.mxu0 0.0
        %2017 = vmatprep.subr.mxu0 0.0
        %2018 = vmatpush1.msra.mxu0 0.0
        %2019 = vmatprep.subr.mxu0 0.0
        %2020 = vmatpush1.msra.mxu0 0.0
        %2021 = vmatprep.subr.mxu0 0.0
        %2022 = vmatpush1.msra.mxu0 0.0
        %2023 = vmatprep.subr.mxu0 0.0
        %2024 = vmatpush1.msra.mxu0 0.0
        %2025 = vmatprep.subr.mxu0 0.0
        %2026 = vmatpush1.msra.mxu0 0.0
        %2027 = vmatprep.subr.mxu0 0.0
        %2028 = vmatpush1.msra.mxu0 0.0
        %2029 = vmatprep.subr.mxu0 0.0
        %2030 = vmatpush1.msra.mxu0 0.0
        %2031 = vmatprep.subr.mxu0 0.0
        %2032 = vmatpush1.msra.mxu0 0.0
        %2033 = vmatprep.subr.mxu0 0.0
        %2034 = vmatpush1.msra.mxu0 0.0
        %2035 = vmatprep.subr.mxu0 0.0
        %2036 = vmatpush1.msra.mxu0 0.0
        %2037 = vmatprep.mubr.f32.mxu0 0.0
        %2038 = vmatmul.mubr.f32.gmra.mrb[0].mxu0 %v1971
        %v2039 = vpop.f32.mrb[0].mxu0
        %v2040 = vadd.f32 %v1969, %v2039
        %v2041 = vpop.f32.mrb[0].mxu0
        %2042 = vdwg.mxu0
        %vm2043 = vcmask 73728
        %2044 = vst.msk [vmem:[%s594] sm:$0x1] %vm2043, %v2040
        %s2045 = sand.u32 %s445, 1
        %s2046 = scalar_lea.sflag [#allocation3], %s2045
        %s2047 = sand.u32 %s445, 1
        %s2048 = scalar_lea.vmem [#allocation2], %s2047
        // Predicated region
        $region97: #{tpu_custom_call.1} parent=95 // pred_check
          %p2049 = pneg %p455
        $region98: #{tpu_custom_call.1} parent=95 // pred_check_branch
          %2051 = sbr.rel (%p2049) target = $region100
        $region99: #{tpu_custom_call.1} parent=95 // pred_region
          %s2053 = ssub.s32 16, 16
          %2054 = vsyncadd %s2046, %s2053
          %s2055 = smul.addr %s33, 16
          %s2056 = scalar_lea.hbm %s19, %s2055
          %s2058 = sshll.u32 %s2048, 4
          %s2059 = int_to_ptr.vmem [resolvable:$true] %s2058
          %2061 = dma.vmem_to_hbm [thread:$0]  %s2059, 16, %s2056, %s2046
        $region100: #{tpu_custom_call.1} parent=95 // pred_fallthru
          _
      $region96: #{tpu_custom_call.1} parent=5 // pred_fallthru
        _
      %p2062 = scmp.le.s32.totalorder 2, %s28
      // Predicated region
      $region101: #{tpu_custom_call.1} parent=5 // pred_check
        %p2063 = pneg %p2062
      $region102: #{tpu_custom_call.1} parent=5 // pred_check_branch
        %2065 = sbr.rel (%p2063) target = $region104
      $region103: #{tpu_custom_call.1} parent=5 // pred_region
        %s2066 = ssub.s32 %s28, 2
        // Predicated region
        $region105: #{tpu_custom_call.1} parent=103 // pred_check
          %p2067 = pneg %p461
        $region106: #{tpu_custom_call.1} parent=103 // pred_check_branch
          %2069 = sbr.rel (%p2067) target = $region108
        $region107: #{tpu_custom_call.1} parent=103 // pred_region
          %s2070 = sand.u32 %s446, 1
          %s2071 = scalar_lea.sflag [#allocation3], %s2070
          %s2072 = sand.u32 %s446, 1
          %s2073 = scalar_lea.vmem [#allocation2], %s2072
          %2074 = dma.done %s2071, 16
        $region108: #{tpu_custom_call.1} parent=103 // pred_fallthru
          _
      $region104: #{tpu_custom_call.1} parent=5 // pred_fallthru
        _
    $region6: #{tpu_custom_call.1} parent=1 // loop_footer
      %s32 = sadd.s32 1, %s28
    $region7: #{tpu_custom_call.1} parent=1 // loop_footer_branch
      %27 = sbr.rel target = $region3
    $region8: #{tpu_custom_call.1} parent=1 // loop_exit
      _
    %2075 = vsyncpa [#allocation3], 1
    %s2076 = scalar_lea.sflag [#allocation3], 1
    %2077 = vsyncpa %s2076, 1

</llo_original>
